<compile_context>
chip_gen: v5e
topology: v5e:2x2
jax: 0.10.0
libtpu: 0.0.40
codegen_flags: <defaults>
</compile_context>

<pallas_src>
import math
import functools

import numpy as np
import jax
import jax.numpy as jnp
from jax import lax
from jax.experimental import pallas as pl
from jax.experimental.pallas import tpu as pltpu


# --------------------------------------------------------------------------
# Kernel A: modulated 1x1 conv + bias (no skip), per (batch, row-tile) step.
# --------------------------------------------------------------------------
def _to_rgb_conv_kernel(w_eff_ref, bias_ref, x_ref, o_ref):
    # w_eff_ref : (3, C)  bf16, pre-modulated/scaled in the wrapper
    # bias_ref  : (3, 1)  f32
    # x_ref     : (C, TILE_HW) bf16, lane-dense
    # o_ref     : (3, TILE_HW) f32, lane-dense
    y = jnp.dot(w_eff_ref[...], x_ref[...], preferred_element_type=jnp.float32)
    o_ref[...] = (y + bias_ref[...]).astype(o_ref.dtype)


# --------------------------------------------------------------------------
# Kernel B: fused modulated 1x1 conv + bias + blur-upsampled skip add.
# --------------------------------------------------------------------------
def _to_rgb_fused_kernel(w_eff_ref, bias_ref, x_ref, skip_ref, uh_ref, uwt_ref,
                         o_ref, up_ref, *, n_rgb, tile_h, w_out, w2):
    # w_eff_ref : (3, C)              bf16
    # bias_ref  : (3, 1)              f32
    # x_ref     : (C, TILE_H*W)       bf16 (flattened row tile, lane-dense)
    # skip_ref  : (h2, 3*w2)          bf16 (channels concatenated along lanes,
    #                                       full skip frame, resident per batch)
    # uh_ref    : (TILE_H, h2)        f32  (row-pass upsample matrix, this tile)
    # uwt_ref   : (w2, W)             f32  (column-pass upsample matrix^T)
    # o_ref     : (3, TILE_H*W)       f32
    # up_ref    : (3, TILE_H, W)      f32 VMEM scratch

    # (1) modulated 1x1 conv + bias: one lane-dense MXU matmul per tile.
    y = jnp.dot(w_eff_ref[...], x_ref[...], preferred_element_type=jnp.float32)
    o_ref[...] = (y + bias_ref[...]).astype(o_ref.dtype)

    # (2) separable blur-upsample of the (small, resident) skip for this row
    #     tile: U_h_tile @ skip @ U_w^T.  The row pass batches all RGB
    #     channels along the lane axis (single matmul).
    rows = jnp.dot(uh_ref[...], skip_ref[...].astype(jnp.float32),
                   preferred_element_type=jnp.float32)            # (TILE_H, 3*w2)
    for ch in range(n_rgb):                                       # static, 3
        up_ref[ch] = jnp.dot(rows[:, ch * w2:(ch + 1) * w2], uwt_ref[...],
                             preferred_element_type=jnp.float32)  # (TILE_H, W)

    # (3) add the upsampled skip into the flattened output block row by row.
    #     The (TILE_H, W) -> (TILE_H*W,) relayout goes through the VMEM
    #     scratch with static slices only.
    for ch in range(n_rgb):
        for r in range(tile_h):
            sl = slice(r * w_out, (r + 1) * w_out)
            o_ref[ch:ch + 1, sl] = (o_ref[ch:ch + 1, sl]
                                    + up_ref[ch, r:r + 1, :].astype(o_ref.dtype))
    # TODO(synk): at very high resolution replace the dense U_h/U_w matmuls and
    # the row-by-row add with a 2-tap polyphase blur on VPU/XLU slots.


# --------------------------------------------------------------------------
# Wrapper-side helpers.
# --------------------------------------------------------------------------
def _upfirdn1d_matrix(n_in, up, pad0, pad1, k1d):
    """(n_out, n_in) matrix such that mat @ s == upfirdn1d(s, k1d, up, pad)."""
    k1d = np.asarray(k1d, dtype=np.float32)
    kh = k1d.shape[0]
    kflip = k1d[::-1]                           # true convolution (as in upfirdn2d)
    n_out = n_in * up + pad0 + pad1 - kh + 1
    mat = np.zeros((n_out, n_in), dtype=np.float32)
    for y in range(n_out):
        for i in range(kh):
            p = y + i - pad0
            if p >= 0 and p % up == 0 and (p // up) < n_in:
                mat[y, p // up] += kflip[i]
    return mat


def _pick_tile_h(h, w, c, elem_bytes, target_bytes, max_rows):
    """Largest row-tile that (a) divides H, (b) keeps TILE_H*W a multiple of
    128 (lane-dense), (c) keeps the x block under `target_bytes`."""
    cands = [th for th in range(8, min(h, max_rows) + 1, 8)
             if h % th == 0 and (th * w) % 128 == 0]
    if not cands:
        return h                                # fall back to full-extent block
    fitting = [th for th in cands if c * th * w * elem_bytes <= target_bytes]
    return max(fitting) if fitting else min(cands)


def to_rgb(x, style, w_rgb, mod_w, mod_b, rgb_bias, skip=None, *,
           lr_mul=1.0, blur_kernel=(1, 3, 3, 1),
           compute_dtype=jnp.bfloat16, out_dtype=jnp.float32,
           tile_target_bytes=4 * 1024 * 1024, max_tile_rows=64):
    """ToRGB forward.

    x        : (B, C, H, W)
    style    : (B, style_dim)
    w_rgb    : (3, C)          -- ModulatedConv2d weight (1,3,C,1,1) squeezed
    mod_w    : (C, style_dim)  -- modulation EqualLinear weight
    mod_b    : (C,)            -- modulation EqualLinear bias
    rgb_bias : (3,)            -- ToRGB bias (1,3,1,1) squeezed
    skip     : optional (B, 3, H//2, W//2)
    """
    b, c, h, w = x.shape
    _, style_dim = style.shape
    n_rgb = w_rgb.shape[0]
    hw = h * w

    # ---- style modulation + weight folding hoisted out of the kernel -------
    mod_scale = (1.0 / math.sqrt(style_dim)) * lr_mul
    s = jnp.dot(style.astype(jnp.float32),
                (mod_w.astype(jnp.float32) * mod_scale).T)
    s = s + mod_b.astype(jnp.float32) * lr_mul                      # (B, C)
    conv_scale = 1.0 / math.sqrt(c)                                 # fan_in = C*1*1
    w_eff = (conv_scale * w_rgb.astype(jnp.float32))[None, :, :] * s[:, None, :]
    w_eff = w_eff.astype(compute_dtype)                             # (B, 3, C)
    bias_col = rgb_bias.astype(jnp.float32).reshape(n_rgb, 1)        # (3, 1)

    # ---- stream the dominant activation in bf16, lane-dense flattened ------
    # (In a real pipeline the producer should already emit bf16.)
    x_flat = x.reshape(b, c, hw).astype(compute_dtype)               # (B, C, HW)

    elem = jnp.dtype(compute_dtype).itemsize
    oelem = jnp.dtype(out_dtype).itemsize
    tile_h = _pick_tile_h(h, w, c, elem, tile_target_bytes, max_tile_rows)
    n_ht = h // tile_h
    tile_hw = tile_h * w

    base_blk = (c * tile_hw * elem          # x tile
                + n_rgb * tile_hw * oelem   # out tile
                + n_rgb * c * elem          # w_eff
                + n_rgb * 4)                # bias

    # -------------------------- no-skip path --------------------------------
    if skip is None:
        vmem_limit = int(min(60 * 2 ** 20, max(32 * 2 ** 20, 3 * base_blk)))
        out_flat = pl.pallas_call(
            _to_rgb_conv_kernel,
            out_shape=jax.ShapeDtypeStruct((b, n_rgb, hw), out_dtype),
            grid=(b, n_ht),
            in_specs=[
                pl.BlockSpec((None, n_rgb, c), lambda ib, ih: (ib, 0, 0)),
                pl.BlockSpec((n_rgb, 1), lambda ib, ih: (0, 0)),
                pl.BlockSpec((None, c, tile_hw), lambda ib, ih: (ib, 0, ih)),
            ],
            out_specs=pl.BlockSpec((None, n_rgb, tile_hw),
                                   lambda ib, ih: (ib, 0, ih)),
            compiler_params=pltpu.CompilerParams(
                dimension_semantics=("parallel", "parallel"),
                vmem_limit_bytes=vmem_limit),
        )(w_eff, bias_col, x_flat)
        return out_flat.reshape(b, n_rgb, h, w)

    # -------------------------- fused skip path -----------------------------
    _, _, h2, w2 = skip.shape
    assert h == 2 * h2 and w == 2 * w2, "skip must be half resolution"

    factor = 2
    k1d = np.asarray(blur_kernel, np.float32)
    # make_kernel(blur) * factor**2 == outer(k1d_sep, k1d_sep)
    k1d_sep = k1d * (factor / k1d.sum())
    p = len(blur_kernel) - factor
    pad0 = (p + 1) // 2 + factor - 1
    pad1 = p // 2
    u_h_np = _upfirdn1d_matrix(h2, factor, pad0, pad1, k1d_sep)      # (H, h2)
    u_w_np = _upfirdn1d_matrix(w2, factor, pad0, pad1, k1d_sep)      # (W, w2)
    assert u_h_np.shape == (h, h2) and u_w_np.shape == (w, w2)
    u_h = jnp.asarray(u_h_np)                                        # (H, h2) f32
    u_w_t = jnp.asarray(u_w_np.T)                                    # (w2, W) f32

    # Channels concatenated along lanes so the row pass is one matmul.
    skip_wide = jnp.transpose(skip, (0, 2, 1, 3)).reshape(b, h2, n_rgb * w2)
    skip_wide = skip_wide.astype(compute_dtype)                      # (B, h2, 3*w2)

    blk = base_blk + (h2 * n_rgb * w2 * elem     # skip_wide (resident per batch)
                      + tile_h * h2 * 4          # U_h tile
                      + w2 * w * 4               # U_w^T (resident)
                      + n_rgb * tile_h * w * 4)  # scratch
    vmem_limit = int(min(60 * 2 ** 20, max(32 * 2 ** 20, 3 * blk)))

    kernel = functools.partial(_to_rgb_fused_kernel, n_rgb=n_rgb,
                               tile_h=tile_h, w_out=w, w2=w2)
    out_flat = pl.pallas_call(
        kernel,
        out_shape=jax.ShapeDtypeStruct((b, n_rgb, hw), out_dtype),
        grid=(b, n_ht),
        in_specs=[
            pl.BlockSpec((None, n_rgb, c), lambda ib, ih: (ib, 0, 0)),
            pl.BlockSpec((n_rgb, 1), lambda ib, ih: (0, 0)),
            pl.BlockSpec((None, c, tile_hw), lambda ib, ih: (ib, 0, ih)),
            pl.BlockSpec((None, h2, n_rgb * w2), lambda ib, ih: (ib, 0, 0)),
            pl.BlockSpec((tile_h, h2), lambda ib, ih: (ih, 0)),
            pl.BlockSpec((w2, w), lambda ib, ih: (0, 0)),
        ],
        out_specs=pl.BlockSpec((None, n_rgb, tile_hw),
                               lambda ib, ih: (ib, 0, ih)),
        scratch_shapes=[pltpu.VMEM((n_rgb, tile_h, w), jnp.float32)],
        compiler_params=pltpu.CompilerParams(
            dimension_semantics=("parallel", "parallel"),
            vmem_limit_bytes=vmem_limit),
    )(w_eff, bias_col, x_flat, skip_wide, u_h, u_w_t)
    return out_flat.reshape(b, n_rgb, h, w)


# --------------------------------------------------------------------------
# Pure-JAX reference mirroring the PyTorch forward exactly (f32, HIGHEST).
# --------------------------------------------------------------------------
def _upfirdn2d_up2_ref(x, blur_kernel=(1, 3, 3, 1), factor=2):
    b, c, h, w = x.shape
    k1 = jnp.asarray(blur_kernel, jnp.float32)
    k2d = jnp.outer(k1, k1)
    k2d = k2d / k2d.sum() * (factor ** 2)
    p = k2d.shape[0] - factor
    pad0 = (p + 1) // 2 + factor - 1
    pad1 = p // 2
    up = jnp.zeros((b, c, h * factor, w * factor), x.dtype)
    up = up.at[:, :, ::factor, ::factor].set(x)
    up = jnp.pad(up, ((0, 0), (0, 0), (pad0, pad1), (pad0, pad1)))
    kf = jnp.flip(k2d)  # upfirdn2d convolves with the flipped kernel
    lhs = up.reshape(b * c, 1, up.shape[2], up.shape[3])
    out = lax.conv_general_dilated(lhs, kf[None, None, :, :], (1, 1), "VALID",
                                   precision=lax.Precision.HIGHEST)
    return out.reshape(b, c, h * factor, w * factor)


def _to_rgb_reference(x, style, w_rgb, mod_w, mod_b, rgb_bias, skip=None,
                      lr_mul=1.0):
    b, c, h, w = x.shape
    style_dim = style.shape[1]
    mod_scale = (1.0 / math.sqrt(style_dim)) * lr_mul
    s = jnp.dot(style, (mod_w * mod_scale).T,
                precision=lax.Precision.HIGHEST) + mod_b * lr_mul     # (B, C)
    conv_scale = 1.0 / math.sqrt(c)
    weight = conv_scale * w_rgb[None, :, :] * s[:, None, :]           # (B, 3, C)
    out = jnp.einsum('boc,bchw->bohw', weight, x,
                     precision=lax.Precision.HIGHEST)
    out = out + rgb_bias.reshape(1, -1, 1, 1)
    if skip is not None:
        out = out + _upfirdn2d_up2_ref(skip)
    return out


if __name__ == "__main__":
    key = jax.random.PRNGKey(0)
    k_x, k_s, k_w, k_mw, k_mb, k_b, k_skip = jax.random.split(key, 7)

    batch, in_channel, style_dim = 2, 64, 32
    height = width = 16
    n_rgb = 3

    x = jax.random.normal(k_x, (batch, in_channel, height, width), jnp.float32)
    style = jax.random.normal(k_s, (batch, style_dim), jnp.float32)
    skip = jax.random.normal(k_skip, (batch, n_rgb, height // 2, width // 2),
                             jnp.float32)

    # ModulatedConv2d weight (1, 3, C, 1, 1) -> (3, C)
    w_rgb = jax.random.normal(k_w, (n_rgb, in_channel), jnp.float32)
    # modulation EqualLinear(style_dim, in_channel, bias_init=1), lr_mul=1
    mod_w = jax.random.normal(k_mw, (in_channel, style_dim), jnp.float32)
    mod_b = (jnp.ones((in_channel,), jnp.float32)
             + 0.1 * jax.random.normal(k_mb, (in_channel,), jnp.float32))
    # ToRGB bias (1, 3, 1, 1) -> (3,); nonzero to exercise the add
    rgb_bias = 0.1 * jax.random.normal(k_b, (n_rgb,), jnp.float32)

    # bf16 streaming vs f32 HIGHEST reference -> slightly relaxed tolerance
    tol = dict(atol=3e-2, rtol=3e-2)

    ref = _to_rgb_reference(x, style, w_rgb, mod_w, mod_b, rgb_bias, skip=skip)
    ref_ns = _to_rgb_reference(x, style, w_rgb, mod_w, mod_b, rgb_bias, skip=None)

    # 1) fused conv + bias + blur-upsampled skip (single row tile)
    out = jax.block_until_ready(
        to_rgb(x, style, w_rgb, mod_w, mod_b, rgb_bias, skip=skip))
    assert out.shape == (batch, n_rgb, height, width)
    assert jnp.allclose(out, ref, **tol), "mismatch (with skip)"

    # 2) no-skip path
    out_ns = jax.block_until_ready(
        to_rgb(x, style, w_rgb, mod_w, mod_b, rgb_bias, skip=None))
    assert jnp.allclose(out_ns, ref_ns, **tol), "mismatch (no skip)"

    # 3) fused path with a tiny tile budget to force multiple H row-tiles
    out_mt = jax.block_until_ready(
        to_rgb(x, style, w_rgb, mod_w, mod_b, rgb_bias, skip=skip,
               tile_target_bytes=8 * 1024))
    assert jnp.allclose(out_mt, ref, **tol), "mismatch (with skip, multi-tile)"

    print("KERNEL_OK")
</pallas_src>

<mosaic_0001>
module attributes {stable_mosaic.version = 11 : i64} {
  func.func @_to_rgb_fused_kernel(%arg0: i32, %arg1: i32, %arg2: memref<1x3x64xbf16, #tpu.memory_space<vmem>>, %arg3: memref<3x1xf32, #tpu.memory_space<vmem>>, %arg4: memref<1x64x256xbf16, #tpu.memory_space<vmem>>, %arg5: memref<1x8x24xbf16, #tpu.memory_space<vmem>>, %arg6: memref<16x8xf32, #tpu.memory_space<vmem>>, %arg7: memref<8x16xf32, #tpu.memory_space<vmem>>, %arg8: memref<1x3x256xf32, #tpu.memory_space<vmem>>, %arg9: memref<3x16x16xf32, #tpu.memory_space<vmem>>) attributes {dimension_semantics = [#tpu.dimension_semantics<parallel>, #tpu.dimension_semantics<parallel>], iteration_bounds = array<i64: 2, 1>, scalar_prefetch = 0 : i64, scratch_operands = 1 : i64, tpu.core_type = #tpu.core_type<tc>, window_params = [{transform_indices = @transform_0, window_bounds = array<i64: 1, 3, 64>}, {pipeline_mode = #tpu.pipeline_mode<synchronous>, transform_indices = @transform_1, window_bounds = array<i64: 3, 1>}, {transform_indices = @transform_2, window_bounds = array<i64: 1, 64, 256>}, {transform_indices = @transform_3, window_bounds = array<i64: 1, 8, 24>}, {transform_indices = @transform_4, window_bounds = array<i64: 16, 8>}, {pipeline_mode = #tpu.pipeline_mode<synchronous>, transform_indices = @transform_5, window_bounds = array<i64: 8, 16>}, {transform_indices = @transform_6, window_bounds = array<i64: 1, 3, 256>}]} {
    %c0 = arith.constant 0 : index
    %c0_0 = arith.constant 0 : index
    %c0_1 = arith.constant 0 : index
    %0 = vector.load %arg2[%c0, %c0_0, %c0_1] : memref<1x3x64xbf16, #tpu.memory_space<vmem>>, vector<1x3x64xbf16>
    %1 = vector.shape_cast %0 : vector<1x3x64xbf16> to vector<3x64xbf16>
    %c0_2 = arith.constant 0 : index
    %c0_3 = arith.constant 0 : index
    %c0_4 = arith.constant 0 : index
    %2 = vector.load %arg4[%c0_2, %c0_3, %c0_4] : memref<1x64x256xbf16, #tpu.memory_space<vmem>>, vector<1x64x256xbf16>
    %3 = vector.shape_cast %2 : vector<1x64x256xbf16> to vector<64x256xbf16>
    %cst = arith.constant dense<0.000000e+00> : vector<3x256xf32>
    %4 = tpu.matmul %1, %3, %cst {dimension_numbers = #tpu.dot_dimension_numbers<[1], [0], [0], [1], [0, 0, 1, 1], [], []>} : vector<3x64xbf16>, vector<64x256xbf16>, vector<3x256xf32> -> vector<3x256xf32>
    %c0_5 = arith.constant 0 : index
    %c0_6 = arith.constant 0 : index
    %5 = vector.load %arg3[%c0_5, %c0_6] : memref<3x1xf32, #tpu.memory_space<vmem>>, vector<3x1xf32>
    %6 = vector.broadcast %5 : vector<3x1xf32> to vector<3x256xf32>
    %7 = arith.addf %4, %6 : vector<3x256xf32>
    %c0_7 = arith.constant 0 : index
    %c0_8 = arith.constant 0 : index
    %c0_9 = arith.constant 0 : index
    %8 = vector.load %arg8[%c0_7, %c0_8, %c0_9] : memref<1x3x256xf32, #tpu.memory_space<vmem>>, vector<1x3x256xf32>
    %9 = vector.shape_cast %8 : vector<1x3x256xf32> to vector<3x256xf32>
    %10 = vector.shape_cast %7 : vector<3x256xf32> to vector<1x3x256xf32>
    tpu.vector_store %arg8[%c0_7, %c0_8, %c0_9], %10 {strides = array<i32>} : memref<1x3x256xf32, #tpu.memory_space<vmem>>, vector<1x3x256xf32>,
    %c0_10 = arith.constant 0 : index
    %c0_11 = arith.constant 0 : index
    %11 = vector.load %arg6[%c0_10, %c0_11] : memref<16x8xf32, #tpu.memory_space<vmem>>, vector<16x8xf32>
    %c0_12 = arith.constant 0 : index
    %c0_13 = arith.constant 0 : index
    %c0_14 = arith.constant 0 : index
    %12 = vector.load %arg5[%c0_12, %c0_13, %c0_14] : memref<1x8x24xbf16, #tpu.memory_space<vmem>>, vector<1x8x24xbf16>
    %13 = vector.shape_cast %12 : vector<1x8x24xbf16> to vector<8x24xbf16>
    %14 = arith.extf %13 : vector<8x24xbf16> to vector<8x24xf32>
    %cst_15 = arith.constant dense<0.000000e+00> : vector<16x24xf32>
    %15 = tpu.matmul %11, %14, %cst_15 {dimension_numbers = #tpu.dot_dimension_numbers<[1], [0], [0], [1], [0, 0, 1, 1], [], []>} : vector<16x8xf32>, vector<8x24xf32>, vector<16x24xf32> -> vector<16x24xf32>
    %16 = vector.extract_strided_slice %15 {offsets = [0, 0], sizes = [16, 8], strides = [1, 1]} : vector<16x24xf32> to vector<16x8xf32>
    %c0_16 = arith.constant 0 : index
    %c0_17 = arith.constant 0 : index
    %17 = vector.load %arg7[%c0_16, %c0_17] : memref<8x16xf32, #tpu.memory_space<vmem>>, vector<8x16xf32>
    %cst_18 = arith.constant dense<0.000000e+00> : vector<16x16xf32>
    %18 = tpu.matmul %16, %17, %cst_18 {dimension_numbers = #tpu.dot_dimension_numbers<[1], [0], [0], [1], [0, 0, 1, 1], [], []>} : vector<16x8xf32>, vector<8x16xf32>, vector<16x16xf32> -> vector<16x16xf32>
    %c0_19 = arith.constant 0 : index
    %c0_20 = arith.constant 0 : index
    %c0_21 = arith.constant 0 : index
    %19 = vector.load %arg9[%c0_19, %c0_20, %c0_21] : memref<3x16x16xf32, #tpu.memory_space<vmem>>, vector<1x16x16xf32>
    %20 = vector.shape_cast %19 : vector<1x16x16xf32> to vector<16x16xf32>
    %21 = vector.shape_cast %18 : vector<16x16xf32> to vector<1x16x16xf32>
    tpu.vector_store %arg9[%c0_19, %c0_20, %c0_21], %21 {strides = array<i32>} : memref<3x16x16xf32, #tpu.memory_space<vmem>>, vector<1x16x16xf32>,
    %22 = vector.extract_strided_slice %15 {offsets = [0, 8], sizes = [16, 8], strides = [1, 1]} : vector<16x24xf32> to vector<16x8xf32>
    %c0_22 = arith.constant 0 : index
    %c0_23 = arith.constant 0 : index
    %23 = vector.load %arg7[%c0_22, %c0_23] : memref<8x16xf32, #tpu.memory_space<vmem>>, vector<8x16xf32>
    %cst_24 = arith.constant dense<0.000000e+00> : vector<16x16xf32>
    %24 = tpu.matmul %22, %23, %cst_24 {dimension_numbers = #tpu.dot_dimension_numbers<[1], [0], [0], [1], [0, 0, 1, 1], [], []>} : vector<16x8xf32>, vector<8x16xf32>, vector<16x16xf32> -> vector<16x16xf32>
    %c1 = arith.constant 1 : index
    %c0_25 = arith.constant 0 : index
    %c0_26 = arith.constant 0 : index
    %25 = vector.load %arg9[%c1, %c0_25, %c0_26] : memref<3x16x16xf32, #tpu.memory_space<vmem>>, vector<1x16x16xf32>
    %26 = vector.shape_cast %25 : vector<1x16x16xf32> to vector<16x16xf32>
    %27 = vector.shape_cast %24 : vector<16x16xf32> to vector<1x16x16xf32>
    tpu.vector_store %arg9[%c1, %c0_25, %c0_26], %27 {strides = array<i32>} : memref<3x16x16xf32, #tpu.memory_space<vmem>>, vector<1x16x16xf32>,
    %28 = vector.extract_strided_slice %15 {offsets = [0, 16], sizes = [16, 8], strides = [1, 1]} : vector<16x24xf32> to vector<16x8xf32>
    %c0_27 = arith.constant 0 : index
    %c0_28 = arith.constant 0 : index
    %29 = vector.load %arg7[%c0_27, %c0_28] : memref<8x16xf32, #tpu.memory_space<vmem>>, vector<8x16xf32>
    %cst_29 = arith.constant dense<0.000000e+00> : vector<16x16xf32>
    %30 = tpu.matmul %28, %29, %cst_29 {dimension_numbers = #tpu.dot_dimension_numbers<[1], [0], [0], [1], [0, 0, 1, 1], [], []>} : vector<16x8xf32>, vector<8x16xf32>, vector<16x16xf32> -> vector<16x16xf32>
    %c2 = arith.constant 2 : index
    %c0_30 = arith.constant 0 : index
    %c0_31 = arith.constant 0 : index
    %31 = vector.load %arg9[%c2, %c0_30, %c0_31] : memref<3x16x16xf32, #tpu.memory_space<vmem>>, vector<1x16x16xf32>
    %32 = vector.shape_cast %31 : vector<1x16x16xf32> to vector<16x16xf32>
    %33 = vector.shape_cast %30 : vector<16x16xf32> to vector<1x16x16xf32>
    tpu.vector_store %arg9[%c2, %c0_30, %c0_31], %33 {strides = array<i32>} : memref<3x16x16xf32, #tpu.memory_space<vmem>>, vector<1x16x16xf32>,
    %c0_32 = arith.constant 0 : index
    %c0_33 = arith.constant 0 : index
    %c0_34 = arith.constant 0 : index
    %34 = vector.load %arg8[%c0_32, %c0_33, %c0_34] : memref<1x3x256xf32, #tpu.memory_space<vmem>>, vector<1x1x16xf32>
    %35 = vector.shape_cast %34 : vector<1x1x16xf32> to vector<1x16xf32>
    %c0_35 = arith.constant 0 : index
    %c0_36 = arith.constant 0 : index
    %c0_37 = arith.constant 0 : index
    %36 = vector.load %arg9[%c0_35, %c0_36, %c0_37] : memref<3x16x16xf32, #tpu.memory_space<vmem>>, vector<1x1x16xf32>
    %37 = vector.shape_cast %36 : vector<1x1x16xf32> to vector<1x16xf32>
    %38 = arith.addf %35, %37 : vector<1x16xf32>
    %c0_38 = arith.constant 0 : index
    %c0_39 = arith.constant 0 : index
    %c0_40 = arith.constant 0 : index
    %39 = vector.load %arg8[%c0_38, %c0_39, %c0_40] : memref<1x3x256xf32, #tpu.memory_space<vmem>>, vector<1x1x16xf32>
    %40 = vector.shape_cast %39 : vector<1x1x16xf32> to vector<1x16xf32>
    %41 = vector.shape_cast %38 : vector<1x16xf32> to vector<1x1x16xf32>
    tpu.vector_store %arg8[%c0_38, %c0_39, %c0_40], %41 {strides = array<i32>} : memref<1x3x256xf32, #tpu.memory_space<vmem>>, vector<1x1x16xf32>,
    %c0_41 = arith.constant 0 : index
    %c0_42 = arith.constant 0 : index
    %c16 = arith.constant 16 : index
    %42 = vector.load %arg8[%c0_41, %c0_42, %c16] : memref<1x3x256xf32, #tpu.memory_space<vmem>>, vector<1x1x16xf32>
    %43 = vector.shape_cast %42 : vector<1x1x16xf32> to vector<1x16xf32>
    %c0_43 = arith.constant 0 : index
    %c1_44 = arith.constant 1 : index
    %c0_45 = arith.constant 0 : index
    %44 = vector.load %arg9[%c0_43, %c1_44, %c0_45] : memref<3x16x16xf32, #tpu.memory_space<vmem>>, vector<1x1x16xf32>
    %45 = vector.shape_cast %44 : vector<1x1x16xf32> to vector<1x16xf32>
    %46 = arith.addf %43, %45 : vector<1x16xf32>
    %c0_46 = arith.constant 0 : index
    %c0_47 = arith.constant 0 : index
    %c16_48 = arith.constant 16 : index
    %47 = vector.load %arg8[%c0_46, %c0_47, %c16_48] : memref<1x3x256xf32, #tpu.memory_space<vmem>>, vector<1x1x16xf32>
    %48 = vector.shape_cast %47 : vector<1x1x16xf32> to vector<1x16xf32>
    %49 = vector.shape_cast %46 : vector<1x16xf32> to vector<1x1x16xf32>
    tpu.vector_store %arg8[%c0_46, %c0_47, %c16_48], %49 {strides = array<i32>} : memref<1x3x256xf32, #tpu.memory_space<vmem>>, vector<1x1x16xf32>,
    %c0_49 = arith.constant 0 : index
    %c0_50 = arith.constant 0 : index
    %c32 = arith.constant 32 : index
    %50 = vector.load %arg8[%c0_49, %c0_50, %c32] : memref<1x3x256xf32, #tpu.memory_space<vmem>>, vector<1x1x16xf32>
    %51 = vector.shape_cast %50 : vector<1x1x16xf32> to vector<1x16xf32>
    %c0_51 = arith.constant 0 : index
    %c2_52 = arith.constant 2 : index
    %c0_53 = arith.constant 0 : index
    %52 = vector.load %arg9[%c0_51, %c2_52, %c0_53] : memref<3x16x16xf32, #tpu.memory_space<vmem>>, vector<1x1x16xf32>
    %53 = vector.shape_cast %52 : vector<1x1x16xf32> to vector<1x16xf32>
    %54 = arith.addf %51, %53 : vector<1x16xf32>
    %c0_54 = arith.constant 0 : index
    %c0_55 = arith.constant 0 : index
    %c32_56 = arith.constant 32 : index
    %55 = vector.load %arg8[%c0_54, %c0_55, %c32_56] : memref<1x3x256xf32, #tpu.memory_space<vmem>>, vector<1x1x16xf32>
    %56 = vector.shape_cast %55 : vector<1x1x16xf32> to vector<1x16xf32>
    %57 = vector.shape_cast %54 : vector<1x16xf32> to vector<1x1x16xf32>
    tpu.vector_store %arg8[%c0_54, %c0_55, %c32_56], %57 {strides = array<i32>} : memref<1x3x256xf32, #tpu.memory_space<vmem>>, vector<1x1x16xf32>,
    %c0_57 = arith.constant 0 : index
    %c0_58 = arith.constant 0 : index
    %c48 = arith.constant 48 : index
    %58 = vector.load %arg8[%c0_57, %c0_58, %c48] : memref<1x3x256xf32, #tpu.memory_space<vmem>>, vector<1x1x16xf32>
    %59 = vector.shape_cast %58 : vector<1x1x16xf32> to vector<1x16xf32>
    %c0_59 = arith.constant 0 : index
    %c3 = arith.constant 3 : index
    %c0_60 = arith.constant 0 : index
    %60 = vector.load %arg9[%c0_59, %c3, %c0_60] : memref<3x16x16xf32, #tpu.memory_space<vmem>>, vector<1x1x16xf32>
    %61 = vector.shape_cast %60 : vector<1x1x16xf32> to vector<1x16xf32>
    %62 = arith.addf %59, %61 : vector<1x16xf32>
    %c0_61 = arith.constant 0 : index
    %c0_62 = arith.constant 0 : index
    %c48_63 = arith.constant 48 : index
    %63 = vector.load %arg8[%c0_61, %c0_62, %c48_63] : memref<1x3x256xf32, #tpu.memory_space<vmem>>, vector<1x1x16xf32>
    %64 = vector.shape_cast %63 : vector<1x1x16xf32> to vector<1x16xf32>
    %65 = vector.shape_cast %62 : vector<1x16xf32> to vector<1x1x16xf32>
    tpu.vector_store %arg8[%c0_61, %c0_62, %c48_63], %65 {strides = array<i32>} : memref<1x3x256xf32, #tpu.memory_space<vmem>>, vector<1x1x16xf32>,
    %c0_64 = arith.constant 0 : index
    %c0_65 = arith.constant 0 : index
    %c64 = arith.constant 64 : index
    %66 = vector.load %arg8[%c0_64, %c0_65, %c64] : memref<1x3x256xf32, #tpu.memory_space<vmem>>, vector<1x1x16xf32>
    %67 = vector.shape_cast %66 : vector<1x1x16xf32> to vector<1x16xf32>
    %c0_66 = arith.constant 0 : index
    %c4 = arith.constant 4 : index
    %c0_67 = arith.constant 0 : index
    %68 = vector.load %arg9[%c0_66, %c4, %c0_67] : memref<3x16x16xf32, #tpu.memory_space<vmem>>, vector<1x1x16xf32>
    %69 = vector.shape_cast %68 : vector<1x1x16xf32> to vector<1x16xf32>
    %70 = arith.addf %67, %69 : vector<1x16xf32>
    %c0_68 = arith.constant 0 : index
    %c0_69 = arith.constant 0 : index
    %c64_70 = arith.constant 64 : index
    %71 = vector.load %arg8[%c0_68, %c0_69, %c64_70] : memref<1x3x256xf32, #tpu.memory_space<vmem>>, vector<1x1x16xf32>
    %72 = vector.shape_cast %71 : vector<1x1x16xf32> to vector<1x16xf32>
    %73 = vector.shape_cast %70 : vector<1x16xf32> to vector<1x1x16xf32>
    tpu.vector_store %arg8[%c0_68, %c0_69, %c64_70], %73 {strides = array<i32>} : memref<1x3x256xf32, #tpu.memory_space<vmem>>, vector<1x1x16xf32>,
    %c0_71 = arith.constant 0 : index
    %c0_72 = arith.constant 0 : index
    %c80 = arith.constant 80 : index
    %74 = vector.load %arg8[%c0_71, %c0_72, %c80] : memref<1x3x256xf32, #tpu.memory_space<vmem>>, vector<1x1x16xf32>
    %75 = vector.shape_cast %74 : vector<1x1x16xf32> to vector<1x16xf32>
    %c0_73 = arith.constant 0 : index
    %c5 = arith.constant 5 : index
    %c0_74 = arith.constant 0 : index
    %76 = vector.load %arg9[%c0_73, %c5, %c0_74] : memref<3x16x16xf32, #tpu.memory_space<vmem>>, vector<1x1x16xf32>
    %77 = vector.shape_cast %76 : vector<1x1x16xf32> to vector<1x16xf32>
    %78 = arith.addf %75, %77 : vector<1x16xf32>
    %c0_75 = arith.constant 0 : index
    %c0_76 = arith.constant 0 : index
    %c80_77 = arith.constant 80 : index
    %79 = vector.load %arg8[%c0_75, %c0_76, %c80_77] : memref<1x3x256xf32, #tpu.memory_space<vmem>>, vector<1x1x16xf32>
    %80 = vector.shape_cast %79 : vector<1x1x16xf32> to vector<1x16xf32>
    %81 = vector.shape_cast %78 : vector<1x16xf32> to vector<1x1x16xf32>
    tpu.vector_store %arg8[%c0_75, %c0_76, %c80_77], %81 {strides = array<i32>} : memref<1x3x256xf32, #tpu.memory_space<vmem>>, vector<1x1x16xf32>,
    %c0_78 = arith.constant 0 : index
    %c0_79 = arith.constant 0 : index
    %c96 = arith.constant 96 : index
    %82 = vector.load %arg8[%c0_78, %c0_79, %c96] : memref<1x3x256xf32, #tpu.memory_space<vmem>>, vector<1x1x16xf32>
    %83 = vector.shape_cast %82 : vector<1x1x16xf32> to vector<1x16xf32>
    %c0_80 = arith.constant 0 : index
    %c6 = arith.constant 6 : index
    %c0_81 = arith.constant 0 : index
    %84 = vector.load %arg9[%c0_80, %c6, %c0_81] : memref<3x16x16xf32, #tpu.memory_space<vmem>>, vector<1x1x16xf32>
    %85 = vector.shape_cast %84 : vector<1x1x16xf32> to vector<1x16xf32>
    %86 = arith.addf %83, %85 : vector<1x16xf32>
    %c0_82 = arith.constant 0 : index
    %c0_83 = arith.constant 0 : index
    %c96_84 = arith.constant 96 : index
    %87 = vector.load %arg8[%c0_82, %c0_83, %c96_84] : memref<1x3x256xf32, #tpu.memory_space<vmem>>, vector<1x1x16xf32>
    %88 = vector.shape_cast %87 : vector<1x1x16xf32> to vector<1x16xf32>
    %89 = vector.shape_cast %86 : vector<1x16xf32> to vector<1x1x16xf32>
    tpu.vector_store %arg8[%c0_82, %c0_83, %c96_84], %89 {strides = array<i32>} : memref<1x3x256xf32, #tpu.memory_space<vmem>>, vector<1x1x16xf32>,
    %c0_85 = arith.constant 0 : index
    %c0_86 = arith.constant 0 : index
    %c112 = arith.constant 112 : index
    %90 = vector.load %arg8[%c0_85, %c0_86, %c112] : memref<1x3x256xf32, #tpu.memory_space<vmem>>, vector<1x1x16xf32>
    %91 = vector.shape_cast %90 : vector<1x1x16xf32> to vector<1x16xf32>
    %c0_87 = arith.constant 0 : index
    %c7 = arith.constant 7 : index
    %c0_88 = arith.constant 0 : index
    %92 = vector.load %arg9[%c0_87, %c7, %c0_88] : memref<3x16x16xf32, #tpu.memory_space<vmem>>, vector<1x1x16xf32>
    %93 = vector.shape_cast %92 : vector<1x1x16xf32> to vector<1x16xf32>
    %94 = arith.addf %91, %93 : vector<1x16xf32>
    %c0_89 = arith.constant 0 : index
    %c0_90 = arith.constant 0 : index
    %c112_91 = arith.constant 112 : index
    %95 = vector.load %arg8[%c0_89, %c0_90, %c112_91] : memref<1x3x256xf32, #tpu.memory_space<vmem>>, vector<1x1x16xf32>
    %96 = vector.shape_cast %95 : vector<1x1x16xf32> to vector<1x16xf32>
    %97 = vector.shape_cast %94 : vector<1x16xf32> to vector<1x1x16xf32>
    tpu.vector_store %arg8[%c0_89, %c0_90, %c112_91], %97 {strides = array<i32>} : memref<1x3x256xf32, #tpu.memory_space<vmem>>, vector<1x1x16xf32>,
    %c0_92 = arith.constant 0 : index
    %c0_93 = arith.constant 0 : index
    %c128 = arith.constant 128 : index
    %98 = vector.load %arg8[%c0_92, %c0_93, %c128] : memref<1x3x256xf32, #tpu.memory_space<vmem>>, vector<1x1x16xf32>
    %99 = vector.shape_cast %98 : vector<1x1x16xf32> to vector<1x16xf32>
    %c0_94 = arith.constant 0 : index
    %c8 = arith.constant 8 : index
    %c0_95 = arith.constant 0 : index
    %100 = vector.load %arg9[%c0_94, %c8, %c0_95] : memref<3x16x16xf32, #tpu.memory_space<vmem>>, vector<1x1x16xf32>
    %101 = vector.shape_cast %100 : vector<1x1x16xf32> to vector<1x16xf32>
    %102 = arith.addf %99, %101 : vector<1x16xf32>
    %c0_96 = arith.constant 0 : index
    %c0_97 = arith.constant 0 : index
    %c128_98 = arith.constant 128 : index
    %103 = vector.load %arg8[%c0_96, %c0_97, %c128_98] : memref<1x3x256xf32, #tpu.memory_space<vmem>>, vector<1x1x16xf32>
    %104 = vector.shape_cast %103 : vector<1x1x16xf32> to vector<1x16xf32>
    %105 = vector.shape_cast %102 : vector<1x16xf32> to vector<1x1x16xf32>
    tpu.vector_store %arg8[%c0_96, %c0_97, %c128_98], %105 {strides = array<i32>} : memref<1x3x256xf32, #tpu.memory_space<vmem>>, vector<1x1x16xf32>,
    %c0_99 = arith.constant 0 : index
    %c0_100 = arith.constant 0 : index
    %c144 = arith.constant 144 : index
    %106 = vector.load %arg8[%c0_99, %c0_100, %c144] : memref<1x3x256xf32, #tpu.memory_space<vmem>>, vector<1x1x16xf32>
    %107 = vector.shape_cast %106 : vector<1x1x16xf32> to vector<1x16xf32>
    %c0_101 = arith.constant 0 : index
    %c9 = arith.constant 9 : index
    %c0_102 = arith.constant 0 : index
    %108 = vector.load %arg9[%c0_101, %c9, %c0_102] : memref<3x16x16xf32, #tpu.memory_space<vmem>>, vector<1x1x16xf32>
    %109 = vector.shape_cast %108 : vector<1x1x16xf32> to vector<1x16xf32>
    %110 = arith.addf %107, %109 : vector<1x16xf32>
    %c0_103 = arith.constant 0 : index
    %c0_104 = arith.constant 0 : index
    %c144_105 = arith.constant 144 : index
    %111 = vector.load %arg8[%c0_103, %c0_104, %c144_105] : memref<1x3x256xf32, #tpu.memory_space<vmem>>, vector<1x1x16xf32>
    %112 = vector.shape_cast %111 : vector<1x1x16xf32> to vector<1x16xf32>
    %113 = vector.shape_cast %110 : vector<1x16xf32> to vector<1x1x16xf32>
    tpu.vector_store %arg8[%c0_103, %c0_104, %c144_105], %113 {strides = array<i32>} : memref<1x3x256xf32, #tpu.memory_space<vmem>>, vector<1x1x16xf32>,
    %c0_106 = arith.constant 0 : index
    %c0_107 = arith.constant 0 : index
    %c160 = arith.constant 160 : index
    %114 = vector.load %arg8[%c0_106, %c0_107, %c160] : memref<1x3x256xf32, #tpu.memory_space<vmem>>, vector<1x1x16xf32>
    %115 = vector.shape_cast %114 : vector<1x1x16xf32> to vector<1x16xf32>
    %c0_108 = arith.constant 0 : index
    %c10 = arith.constant 10 : index
    %c0_109 = arith.constant 0 : index
    %116 = vector.load %arg9[%c0_108, %c10, %c0_109] : memref<3x16x16xf32, #tpu.memory_space<vmem>>, vector<1x1x16xf32>
    %117 = vector.shape_cast %116 : vector<1x1x16xf32> to vector<1x16xf32>
    %118 = arith.addf %115, %117 : vector<1x16xf32>
    %c0_110 = arith.constant 0 : index
    %c0_111 = arith.constant 0 : index
    %c160_112 = arith.constant 160 : index
    %119 = vector.load %arg8[%c0_110, %c0_111, %c160_112] : memref<1x3x256xf32, #tpu.memory_space<vmem>>, vector<1x1x16xf32>
    %120 = vector.shape_cast %119 : vector<1x1x16xf32> to vector<1x16xf32>
    %121 = vector.shape_cast %118 : vector<1x16xf32> to vector<1x1x16xf32>
    tpu.vector_store %arg8[%c0_110, %c0_111, %c160_112], %121 {strides = array<i32>} : memref<1x3x256xf32, #tpu.memory_space<vmem>>, vector<1x1x16xf32>,
    %c0_113 = arith.constant 0 : index
    %c0_114 = arith.constant 0 : index
    %c176 = arith.constant 176 : index
    %122 = vector.load %arg8[%c0_113, %c0_114, %c176] : memref<1x3x256xf32, #tpu.memory_space<vmem>>, vector<1x1x16xf32>
    %123 = vector.shape_cast %122 : vector<1x1x16xf32> to vector<1x16xf32>
    %c0_115 = arith.constant 0 : index
    %c11 = arith.constant 11 : index
    %c0_116 = arith.constant 0 : index
    %124 = vector.load %arg9[%c0_115, %c11, %c0_116] : memref<3x16x16xf32, #tpu.memory_space<vmem>>, vector<1x1x16xf32>
    %125 = vector.shape_cast %124 : vector<1x1x16xf32> to vector<1x16xf32>
    %126 = arith.addf %123, %125 : vector<1x16xf32>
    %c0_117 = arith.constant 0 : index
    %c0_118 = arith.constant 0 : index
    %c176_119 = arith.constant 176 : index
    %127 = vector.load %arg8[%c0_117, %c0_118, %c176_119] : memref<1x3x256xf32, #tpu.memory_space<vmem>>, vector<1x1x16xf32>
    %128 = vector.shape_cast %127 : vector<1x1x16xf32> to vector<1x16xf32>
    %129 = vector.shape_cast %126 : vector<1x16xf32> to vector<1x1x16xf32>
    tpu.vector_store %arg8[%c0_117, %c0_118, %c176_119], %129 {strides = array<i32>} : memref<1x3x256xf32, #tpu.memory_space<vmem>>, vector<1x1x16xf32>,
    %c0_120 = arith.constant 0 : index
    %c0_121 = arith.constant 0 : index
    %c192 = arith.constant 192 : index
    %130 = vector.load %arg8[%c0_120, %c0_121, %c192] : memref<1x3x256xf32, #tpu.memory_space<vmem>>, vector<1x1x16xf32>
    %131 = vector.shape_cast %130 : vector<1x1x16xf32> to vector<1x16xf32>
    %c0_122 = arith.constant 0 : index
    %c12 = arith.constant 12 : index
    %c0_123 = arith.constant 0 : index
    %132 = vector.load %arg9[%c0_122, %c12, %c0_123] : memref<3x16x16xf32, #tpu.memory_space<vmem>>, vector<1x1x16xf32>
    %133 = vector.shape_cast %132 : vector<1x1x16xf32> to vector<1x16xf32>
    %134 = arith.addf %131, %133 : vector<1x16xf32>
    %c0_124 = arith.constant 0 : index
    %c0_125 = arith.constant 0 : index
    %c192_126 = arith.constant 192 : index
    %135 = vector.load %arg8[%c0_124, %c0_125, %c192_126] : memref<1x3x256xf32, #tpu.memory_space<vmem>>, vector<1x1x16xf32>
    %136 = vector.shape_cast %135 : vector<1x1x16xf32> to vector<1x16xf32>
    %137 = vector.shape_cast %134 : vector<1x16xf32> to vector<1x1x16xf32>
    tpu.vector_store %arg8[%c0_124, %c0_125, %c192_126], %137 {strides = array<i32>} : memref<1x3x256xf32, #tpu.memory_space<vmem>>, vector<1x1x16xf32>,
    %c0_127 = arith.constant 0 : index
    %c0_128 = arith.constant 0 : index
    %c208 = arith.constant 208 : index
    %138 = vector.load %arg8[%c0_127, %c0_128, %c208] : memref<1x3x256xf32, #tpu.memory_space<vmem>>, vector<1x1x16xf32>
    %139 = vector.shape_cast %138 : vector<1x1x16xf32> to vector<1x16xf32>
    %c0_129 = arith.constant 0 : index
    %c13 = arith.constant 13 : index
    %c0_130 = arith.constant 0 : index
    %140 = vector.load %arg9[%c0_129, %c13, %c0_130] : memref<3x16x16xf32, #tpu.memory_space<vmem>>, vector<1x1x16xf32>
    %141 = vector.shape_cast %140 : vector<1x1x16xf32> to vector<1x16xf32>
    %142 = arith.addf %139, %141 : vector<1x16xf32>
    %c0_131 = arith.constant 0 : index
    %c0_132 = arith.constant 0 : index
    %c208_133 = arith.constant 208 : index
    %143 = vector.load %arg8[%c0_131, %c0_132, %c208_133] : memref<1x3x256xf32, #tpu.memory_space<vmem>>, vector<1x1x16xf32>
    %144 = vector.shape_cast %143 : vector<1x1x16xf32> to vector<1x16xf32>
    %145 = vector.shape_cast %142 : vector<1x16xf32> to vector<1x1x16xf32>
    tpu.vector_store %arg8[%c0_131, %c0_132, %c208_133], %145 {strides = array<i32>} : memref<1x3x256xf32, #tpu.memory_space<vmem>>, vector<1x1x16xf32>,
    %c0_134 = arith.constant 0 : index
    %c0_135 = arith.constant 0 : index
    %c224 = arith.constant 224 : index
    %146 = vector.load %arg8[%c0_134, %c0_135, %c224] : memref<1x3x256xf32, #tpu.memory_space<vmem>>, vector<1x1x16xf32>
    %147 = vector.shape_cast %146 : vector<1x1x16xf32> to vector<1x16xf32>
    %c0_136 = arith.constant 0 : index
    %c14 = arith.constant 14 : index
    %c0_137 = arith.constant 0 : index
    %148 = vector.load %arg9[%c0_136, %c14, %c0_137] : memref<3x16x16xf32, #tpu.memory_space<vmem>>, vector<1x1x16xf32>
    %149 = vector.shape_cast %148 : vector<1x1x16xf32> to vector<1x16xf32>
    %150 = arith.addf %147, %149 : vector<1x16xf32>
    %c0_138 = arith.constant 0 : index
    %c0_139 = arith.constant 0 : index
    %c224_140 = arith.constant 224 : index
    %151 = vector.load %arg8[%c0_138, %c0_139, %c224_140] : memref<1x3x256xf32, #tpu.memory_space<vmem>>, vector<1x1x16xf32>
    %152 = vector.shape_cast %151 : vector<1x1x16xf32> to vector<1x16xf32>
    %153 = vector.shape_cast %150 : vector<1x16xf32> to vector<1x1x16xf32>
    tpu.vector_store %arg8[%c0_138, %c0_139, %c224_140], %153 {strides = array<i32>} : memref<1x3x256xf32, #tpu.memory_space<vmem>>, vector<1x1x16xf32>,
    %c0_141 = arith.constant 0 : index
    %c0_142 = arith.constant 0 : index
    %c240 = arith.constant 240 : index
    %154 = vector.load %arg8[%c0_141, %c0_142, %c240] : memref<1x3x256xf32, #tpu.memory_space<vmem>>, vector<1x1x16xf32>
    %155 = vector.shape_cast %154 : vector<1x1x16xf32> to vector<1x16xf32>
    %c0_143 = arith.constant 0 : index
    %c15 = arith.constant 15 : index
    %c0_144 = arith.constant 0 : index
    %156 = vector.load %arg9[%c0_143, %c15, %c0_144] : memref<3x16x16xf32, #tpu.memory_space<vmem>>, vector<1x1x16xf32>
    %157 = vector.shape_cast %156 : vector<1x1x16xf32> to vector<1x16xf32>
    %158 = arith.addf %155, %157 : vector<1x16xf32>
    %c0_145 = arith.constant 0 : index
    %c0_146 = arith.constant 0 : index
    %c240_147 = arith.constant 240 : index
    %159 = vector.load %arg8[%c0_145, %c0_146, %c240_147] : memref<1x3x256xf32, #tpu.memory_space<vmem>>, vector<1x1x16xf32>
    %160 = vector.shape_cast %159 : vector<1x1x16xf32> to vector<1x16xf32>
    %161 = vector.shape_cast %158 : vector<1x16xf32> to vector<1x1x16xf32>
    tpu.vector_store %arg8[%c0_145, %c0_146, %c240_147], %161 {strides = array<i32>} : memref<1x3x256xf32, #tpu.memory_space<vmem>>, vector<1x1x16xf32>,
    %c0_148 = arith.constant 0 : index
    %c1_149 = arith.constant 1 : index
    %c0_150 = arith.constant 0 : index
    %162 = vector.load %arg8[%c0_148, %c1_149, %c0_150] : memref<1x3x256xf32, #tpu.memory_space<vmem>>, vector<1x1x16xf32>
    %163 = vector.shape_cast %162 : vector<1x1x16xf32> to vector<1x16xf32>
    %c1_151 = arith.constant 1 : index
    %c0_152 = arith.constant 0 : index
    %c0_153 = arith.constant 0 : index
    %164 = vector.load %arg9[%c1_151, %c0_152, %c0_153] : memref<3x16x16xf32, #tpu.memory_space<vmem>>, vector<1x1x16xf32>
    %165 = vector.shape_cast %164 : vector<1x1x16xf32> to vector<1x16xf32>
    %166 = arith.addf %163, %165 : vector<1x16xf32>
    %c0_154 = arith.constant 0 : index
    %c1_155 = arith.constant 1 : index
    %c0_156 = arith.constant 0 : index
    %167 = vector.load %arg8[%c0_154, %c1_155, %c0_156] : memref<1x3x256xf32, #tpu.memory_space<vmem>>, vector<1x1x16xf32>
    %168 = vector.shape_cast %167 : vector<1x1x16xf32> to vector<1x16xf32>
    %169 = vector.shape_cast %166 : vector<1x16xf32> to vector<1x1x16xf32>
    tpu.vector_store %arg8[%c0_154, %c1_155, %c0_156], %169 {strides = array<i32>} : memref<1x3x256xf32, #tpu.memory_space<vmem>>, vector<1x1x16xf32>,
    %c0_157 = arith.constant 0 : index
    %c1_158 = arith.constant 1 : index
    %c16_159 = arith.constant 16 : index
    %170 = vector.load %arg8[%c0_157, %c1_158, %c16_159] : memref<1x3x256xf32, #tpu.memory_space<vmem>>, vector<1x1x16xf32>
    %171 = vector.shape_cast %170 : vector<1x1x16xf32> to vector<1x16xf32>
    %c1_160 = arith.constant 1 : index
    %c1_161 = arith.constant 1 : index
    %c0_162 = arith.constant 0 : index
    %172 = vector.load %arg9[%c1_160, %c1_161, %c0_162] : memref<3x16x16xf32, #tpu.memory_space<vmem>>, vector<1x1x16xf32>
    %173 = vector.shape_cast %172 : vector<1x1x16xf32> to vector<1x16xf32>
    %174 = arith.addf %171, %173 : vector<1x16xf32>
    %c0_163 = arith.constant 0 : index
    %c1_164 = arith.constant 1 : index
    %c16_165 = arith.constant 16 : index
    %175 = vector.load %arg8[%c0_163, %c1_164, %c16_165] : memref<1x3x256xf32, #tpu.memory_space<vmem>>, vector<1x1x16xf32>
    %176 = vector.shape_cast %175 : vector<1x1x16xf32> to vector<1x16xf32>
    %177 = vector.shape_cast %174 : vector<1x16xf32> to vector<1x1x16xf32>
    tpu.vector_store %arg8[%c0_163, %c1_164, %c16_165], %177 {strides = array<i32>} : memref<1x3x256xf32, #tpu.memory_space<vmem>>, vector<1x1x16xf32>,
    %c0_166 = arith.constant 0 : index
    %c1_167 = arith.constant 1 : index
    %c32_168 = arith.constant 32 : index
    %178 = vector.load %arg8[%c0_166, %c1_167, %c32_168] : memref<1x3x256xf32, #tpu.memory_space<vmem>>, vector<1x1x16xf32>
    %179 = vector.shape_cast %178 : vector<1x1x16xf32> to vector<1x16xf32>
    %c1_169 = arith.constant 1 : index
    %c2_170 = arith.constant 2 : index
    %c0_171 = arith.constant 0 : index
    %180 = vector.load %arg9[%c1_169, %c2_170, %c0_171] : memref<3x16x16xf32, #tpu.memory_space<vmem>>, vector<1x1x16xf32>
    %181 = vector.shape_cast %180 : vector<1x1x16xf32> to vector<1x16xf32>
    %182 = arith.addf %179, %181 : vector<1x16xf32>
    %c0_172 = arith.constant 0 : index
    %c1_173 = arith.constant 1 : index
    %c32_174 = arith.constant 32 : index
    %183 = vector.load %arg8[%c0_172, %c1_173, %c32_174] : memref<1x3x256xf32, #tpu.memory_space<vmem>>, vector<1x1x16xf32>
    %184 = vector.shape_cast %183 : vector<1x1x16xf32> to vector<1x16xf32>
    %185 = vector.shape_cast %182 : vector<1x16xf32> to vector<1x1x16xf32>
    tpu.vector_store %arg8[%c0_172, %c1_173, %c32_174], %185 {strides = array<i32>} : memref<1x3x256xf32, #tpu.memory_space<vmem>>, vector<1x1x16xf32>,
    %c0_175 = arith.constant 0 : index
    %c1_176 = arith.constant 1 : index
    %c48_177 = arith.constant 48 : index
    %186 = vector.load %arg8[%c0_175, %c1_176, %c48_177] : memref<1x3x256xf32, #tpu.memory_space<vmem>>, vector<1x1x16xf32>
    %187 = vector.shape_cast %186 : vector<1x1x16xf32> to vector<1x16xf32>
    %c1_178 = arith.constant 1 : index
    %c3_179 = arith.constant 3 : index
    %c0_180 = arith.constant 0 : index
    %188 = vector.load %arg9[%c1_178, %c3_179, %c0_180] : memref<3x16x16xf32, #tpu.memory_space<vmem>>, vector<1x1x16xf32>
    %189 = vector.shape_cast %188 : vector<1x1x16xf32> to vector<1x16xf32>
    %190 = arith.addf %187, %189 : vector<1x16xf32>
    %c0_181 = arith.constant 0 : index
    %c1_182 = arith.constant 1 : index
    %c48_183 = arith.constant 48 : index
    %191 = vector.load %arg8[%c0_181, %c1_182, %c48_183] : memref<1x3x256xf32, #tpu.memory_space<vmem>>, vector<1x1x16xf32>
    %192 = vector.shape_cast %191 : vector<1x1x16xf32> to vector<1x16xf32>
    %193 = vector.shape_cast %190 : vector<1x16xf32> to vector<1x1x16xf32>
    tpu.vector_store %arg8[%c0_181, %c1_182, %c48_183], %193 {strides = array<i32>} : memref<1x3x256xf32, #tpu.memory_space<vmem>>, vector<1x1x16xf32>,
    %c0_184 = arith.constant 0 : index
    %c1_185 = arith.constant 1 : index
    %c64_186 = arith.constant 64 : index
    %194 = vector.load %arg8[%c0_184, %c1_185, %c64_186] : memref<1x3x256xf32, #tpu.memory_space<vmem>>, vector<1x1x16xf32>
    %195 = vector.shape_cast %194 : vector<1x1x16xf32> to vector<1x16xf32>
    %c1_187 = arith.constant 1 : index
    %c4_188 = arith.constant 4 : index
    %c0_189 = arith.constant 0 : index
    %196 = vector.load %arg9[%c1_187, %c4_188, %c0_189] : memref<3x16x16xf32, #tpu.memory_space<vmem>>, vector<1x1x16xf32>
    %197 = vector.shape_cast %196 : vector<1x1x16xf32> to vector<1x16xf32>
    %198 = arith.addf %195, %197 : vector<1x16xf32>
    %c0_190 = arith.constant 0 : index
    %c1_191 = arith.constant 1 : index
    %c64_192 = arith.constant 64 : index
    %199 = vector.load %arg8[%c0_190, %c1_191, %c64_192] : memref<1x3x256xf32, #tpu.memory_space<vmem>>, vector<1x1x16xf32>
    %200 = vector.shape_cast %199 : vector<1x1x16xf32> to vector<1x16xf32>
    %201 = vector.shape_cast %198 : vector<1x16xf32> to vector<1x1x16xf32>
    tpu.vector_store %arg8[%c0_190, %c1_191, %c64_192], %201 {strides = array<i32>} : memref<1x3x256xf32, #tpu.memory_space<vmem>>, vector<1x1x16xf32>,
    %c0_193 = arith.constant 0 : index
    %c1_194 = arith.constant 1 : index
    %c80_195 = arith.constant 80 : index
    %202 = vector.load %arg8[%c0_193, %c1_194, %c80_195] : memref<1x3x256xf32, #tpu.memory_space<vmem>>, vector<1x1x16xf32>
    %203 = vector.shape_cast %202 : vector<1x1x16xf32> to vector<1x16xf32>
    %c1_196 = arith.constant 1 : index
    %c5_197 = arith.constant 5 : index
    %c0_198 = arith.constant 0 : index
    %204 = vector.load %arg9[%c1_196, %c5_197, %c0_198] : memref<3x16x16xf32, #tpu.memory_space<vmem>>, vector<1x1x16xf32>
    %205 = vector.shape_cast %204 : vector<1x1x16xf32> to vector<1x16xf32>
    %206 = arith.addf %203, %205 : vector<1x16xf32>
    %c0_199 = arith.constant 0 : index
    %c1_200 = arith.constant 1 : index
    %c80_201 = arith.constant 80 : index
    %207 = vector.load %arg8[%c0_199, %c1_200, %c80_201] : memref<1x3x256xf32, #tpu.memory_space<vmem>>, vector<1x1x16xf32>
    %208 = vector.shape_cast %207 : vector<1x1x16xf32> to vector<1x16xf32>
    %209 = vector.shape_cast %206 : vector<1x16xf32> to vector<1x1x16xf32>
    tpu.vector_store %arg8[%c0_199, %c1_200, %c80_201], %209 {strides = array<i32>} : memref<1x3x256xf32, #tpu.memory_space<vmem>>, vector<1x1x16xf32>,
    %c0_202 = arith.constant 0 : index
    %c1_203 = arith.constant 1 : index
    %c96_204 = arith.constant 96 : index
    %210 = vector.load %arg8[%c0_202, %c1_203, %c96_204] : memref<1x3x256xf32, #tpu.memory_space<vmem>>, vector<1x1x16xf32>
    %211 = vector.shape_cast %210 : vector<1x1x16xf32> to vector<1x16xf32>
    %c1_205 = arith.constant 1 : index
    %c6_206 = arith.constant 6 : index
    %c0_207 = arith.constant 0 : index
    %212 = vector.load %arg9[%c1_205, %c6_206, %c0_207] : memref<3x16x16xf32, #tpu.memory_space<vmem>>, vector<1x1x16xf32>
    %213 = vector.shape_cast %212 : vector<1x1x16xf32> to vector<1x16xf32>
    %214 = arith.addf %211, %213 : vector<1x16xf32>
    %c0_208 = arith.constant 0 : index
    %c1_209 = arith.constant 1 : index
    %c96_210 = arith.constant 96 : index
    %215 = vector.load %arg8[%c0_208, %c1_209, %c96_210] : memref<1x3x256xf32, #tpu.memory_space<vmem>>, vector<1x1x16xf32>
    %216 = vector.shape_cast %215 : vector<1x1x16xf32> to vector<1x16xf32>
    %217 = vector.shape_cast %214 : vector<1x16xf32> to vector<1x1x16xf32>
    tpu.vector_store %arg8[%c0_208, %c1_209, %c96_210], %217 {strides = array<i32>} : memref<1x3x256xf32, #tpu.memory_space<vmem>>, vector<1x1x16xf32>,
    %c0_211 = arith.constant 0 : index
    %c1_212 = arith.constant 1 : index
    %c112_213 = arith.constant 112 : index
    %218 = vector.load %arg8[%c0_211, %c1_212, %c112_213] : memref<1x3x256xf32, #tpu.memory_space<vmem>>, vector<1x1x16xf32>
    %219 = vector.shape_cast %218 : vector<1x1x16xf32> to vector<1x16xf32>
    %c1_214 = arith.constant 1 : index
    %c7_215 = arith.constant 7 : index
    %c0_216 = arith.constant 0 : index
    %220 = vector.load %arg9[%c1_214, %c7_215, %c0_216] : memref<3x16x16xf32, #tpu.memory_space<vmem>>, vector<1x1x16xf32>
    %221 = vector.shape_cast %220 : vector<1x1x16xf32> to vector<1x16xf32>
    %222 = arith.addf %219, %221 : vector<1x16xf32>
    %c0_217 = arith.constant 0 : index
    %c1_218 = arith.constant 1 : index
    %c112_219 = arith.constant 112 : index
    %223 = vector.load %arg8[%c0_217, %c1_218, %c112_219] : memref<1x3x256xf32, #tpu.memory_space<vmem>>, vector<1x1x16xf32>
    %224 = vector.shape_cast %223 : vector<1x1x16xf32> to vector<1x16xf32>
    %225 = vector.shape_cast %222 : vector<1x16xf32> to vector<1x1x16xf32>
    tpu.vector_store %arg8[%c0_217, %c1_218, %c112_219], %225 {strides = array<i32>} : memref<1x3x256xf32, #tpu.memory_space<vmem>>, vector<1x1x16xf32>,
    %c0_220 = arith.constant 0 : index
    %c1_221 = arith.constant 1 : index
    %c128_222 = arith.constant 128 : index
    %226 = vector.load %arg8[%c0_220, %c1_221, %c128_222] : memref<1x3x256xf32, #tpu.memory_space<vmem>>, vector<1x1x16xf32>
    %227 = vector.shape_cast %226 : vector<1x1x16xf32> to vector<1x16xf32>
    %c1_223 = arith.constant 1 : index
    %c8_224 = arith.constant 8 : index
    %c0_225 = arith.constant 0 : index
    %228 = vector.load %arg9[%c1_223, %c8_224, %c0_225] : memref<3x16x16xf32, #tpu.memory_space<vmem>>, vector<1x1x16xf32>
    %229 = vector.shape_cast %228 : vector<1x1x16xf32> to vector<1x16xf32>
    %230 = arith.addf %227, %229 : vector<1x16xf32>
    %c0_226 = arith.constant 0 : index
    %c1_227 = arith.constant 1 : index
    %c128_228 = arith.constant 128 : index
    %231 = vector.load %arg8[%c0_226, %c1_227, %c128_228] : memref<1x3x256xf32, #tpu.memory_space<vmem>>, vector<1x1x16xf32>
    %232 = vector.shape_cast %231 : vector<1x1x16xf32> to vector<1x16xf32>
    %233 = vector.shape_cast %230 : vector<1x16xf32> to vector<1x1x16xf32>
    tpu.vector_store %arg8[%c0_226, %c1_227, %c128_228], %233 {strides = array<i32>} : memref<1x3x256xf32, #tpu.memory_space<vmem>>, vector<1x1x16xf32>,
    %c0_229 = arith.constant 0 : index
    %c1_230 = arith.constant 1 : index
    %c144_231 = arith.constant 144 : index
    %234 = vector.load %arg8[%c0_229, %c1_230, %c144_231] : memref<1x3x256xf32, #tpu.memory_space<vmem>>, vector<1x1x16xf32>
    %235 = vector.shape_cast %234 : vector<1x1x16xf32> to vector<1x16xf32>
    %c1_232 = arith.constant 1 : index
    %c9_233 = arith.constant 9 : index
    %c0_234 = arith.constant 0 : index
    %236 = vector.load %arg9[%c1_232, %c9_233, %c0_234] : memref<3x16x16xf32, #tpu.memory_space<vmem>>, vector<1x1x16xf32>
    %237 = vector.shape_cast %236 : vector<1x1x16xf32> to vector<1x16xf32>
    %238 = arith.addf %235, %237 : vector<1x16xf32>
    %c0_235 = arith.constant 0 : index
    %c1_236 = arith.constant 1 : index
    %c144_237 = arith.constant 144 : index
    %239 = vector.load %arg8[%c0_235, %c1_236, %c144_237] : memref<1x3x256xf32, #tpu.memory_space<vmem>>, vector<1x1x16xf32>
    %240 = vector.shape_cast %239 : vector<1x1x16xf32> to vector<1x16xf32>
    %241 = vector.shape_cast %238 : vector<1x16xf32> to vector<1x1x16xf32>
    tpu.vector_store %arg8[%c0_235, %c1_236, %c144_237], %241 {strides = array<i32>} : memref<1x3x256xf32, #tpu.memory_space<vmem>>, vector<1x1x16xf32>,
    %c0_238 = arith.constant 0 : index
    %c1_239 = arith.constant 1 : index
    %c160_240 = arith.constant 160 : index
    %242 = vector.load %arg8[%c0_238, %c1_239, %c160_240] : memref<1x3x256xf32, #tpu.memory_space<vmem>>, vector<1x1x16xf32>
    %243 = vector.shape_cast %242 : vector<1x1x16xf32> to vector<1x16xf32>
    %c1_241 = arith.constant 1 : index
    %c10_242 = arith.constant 10 : index
    %c0_243 = arith.constant 0 : index
    %244 = vector.load %arg9[%c1_241, %c10_242, %c0_243] : memref<3x16x16xf32, #tpu.memory_space<vmem>>, vector<1x1x16xf32>
    %245 = vector.shape_cast %244 : vector<1x1x16xf32> to vector<1x16xf32>
    %246 = arith.addf %243, %245 : vector<1x16xf32>
    %c0_244 = arith.constant 0 : index
    %c1_245 = arith.constant 1 : index
    %c160_246 = arith.constant 160 : index
    %247 = vector.load %arg8[%c0_244, %c1_245, %c160_246] : memref<1x3x256xf32, #tpu.memory_space<vmem>>, vector<1x1x16xf32>
    %248 = vector.shape_cast %247 : vector<1x1x16xf32> to vector<1x16xf32>
    %249 = vector.shape_cast %246 : vector<1x16xf32> to vector<1x1x16xf32>
    tpu.vector_store %arg8[%c0_244, %c1_245, %c160_246], %249 {strides = array<i32>} : memref<1x3x256xf32, #tpu.memory_space<vmem>>, vector<1x1x16xf32>,
    %c0_247 = arith.constant 0 : index
    %c1_248 = arith.constant 1 : index
    %c176_249 = arith.constant 176 : index
    %250 = vector.load %arg8[%c0_247, %c1_248, %c176_249] : memref<1x3x256xf32, #tpu.memory_space<vmem>>, vector<1x1x16xf32>
    %251 = vector.shape_cast %250 : vector<1x1x16xf32> to vector<1x16xf32>
    %c1_250 = arith.constant 1 : index
    %c11_251 = arith.constant 11 : index
    %c0_252 = arith.constant 0 : index
    %252 = vector.load %arg9[%c1_250, %c11_251, %c0_252] : memref<3x16x16xf32, #tpu.memory_space<vmem>>, vector<1x1x16xf32>
    %253 = vector.shape_cast %252 : vector<1x1x16xf32> to vector<1x16xf32>
    %254 = arith.addf %251, %253 : vector<1x16xf32>
    %c0_253 = arith.constant 0 : index
    %c1_254 = arith.constant 1 : index
    %c176_255 = arith.constant 176 : index
    %255 = vector.load %arg8[%c0_253, %c1_254, %c176_255] : memref<1x3x256xf32, #tpu.memory_space<vmem>>, vector<1x1x16xf32>
    %256 = vector.shape_cast %255 : vector<1x1x16xf32> to vector<1x16xf32>
    %257 = vector.shape_cast %254 : vector<1x16xf32> to vector<1x1x16xf32>
    tpu.vector_store %arg8[%c0_253, %c1_254, %c176_255], %257 {strides = array<i32>} : memref<1x3x256xf32, #tpu.memory_space<vmem>>, vector<1x1x16xf32>,
    %c0_256 = arith.constant 0 : index
    %c1_257 = arith.constant 1 : index
    %c192_258 = arith.constant 192 : index
    %258 = vector.load %arg8[%c0_256, %c1_257, %c192_258] : memref<1x3x256xf32, #tpu.memory_space<vmem>>, vector<1x1x16xf32>
    %259 = vector.shape_cast %258 : vector<1x1x16xf32> to vector<1x16xf32>
    %c1_259 = arith.constant 1 : index
    %c12_260 = arith.constant 12 : index
    %c0_261 = arith.constant 0 : index
    %260 = vector.load %arg9[%c1_259, %c12_260, %c0_261] : memref<3x16x16xf32, #tpu.memory_space<vmem>>, vector<1x1x16xf32>
    %261 = vector.shape_cast %260 : vector<1x1x16xf32> to vector<1x16xf32>
    %262 = arith.addf %259, %261 : vector<1x16xf32>
    %c0_262 = arith.constant 0 : index
    %c1_263 = arith.constant 1 : index
    %c192_264 = arith.constant 192 : index
    %263 = vector.load %arg8[%c0_262, %c1_263, %c192_264] : memref<1x3x256xf32, #tpu.memory_space<vmem>>, vector<1x1x16xf32>
    %264 = vector.shape_cast %263 : vector<1x1x16xf32> to vector<1x16xf32>
    %265 = vector.shape_cast %262 : vector<1x16xf32> to vector<1x1x16xf32>
    tpu.vector_store %arg8[%c0_262, %c1_263, %c192_264], %265 {strides = array<i32>} : memref<1x3x256xf32, #tpu.memory_space<vmem>>, vector<1x1x16xf32>,
    %c0_265 = arith.constant 0 : index
    %c1_266 = arith.constant 1 : index
    %c208_267 = arith.constant 208 : index
    %266 = vector.load %arg8[%c0_265, %c1_266, %c208_267] : memref<1x3x256xf32, #tpu.memory_space<vmem>>, vector<1x1x16xf32>
    %267 = vector.shape_cast %266 : vector<1x1x16xf32> to vector<1x16xf32>
    %c1_268 = arith.constant 1 : index
    %c13_269 = arith.constant 13 : index
    %c0_270 = arith.constant 0 : index
    %268 = vector.load %arg9[%c1_268, %c13_269, %c0_270] : memref<3x16x16xf32, #tpu.memory_space<vmem>>, vector<1x1x16xf32>
    %269 = vector.shape_cast %268 : vector<1x1x16xf32> to vector<1x16xf32>
    %270 = arith.addf %267, %269 : vector<1x16xf32>
    %c0_271 = arith.constant 0 : index
    %c1_272 = arith.constant 1 : index
    %c208_273 = arith.constant 208 : index
    %271 = vector.load %arg8[%c0_271, %c1_272, %c208_273] : memref<1x3x256xf32, #tpu.memory_space<vmem>>, vector<1x1x16xf32>
    %272 = vector.shape_cast %271 : vector<1x1x16xf32> to vector<1x16xf32>
    %273 = vector.shape_cast %270 : vector<1x16xf32> to vector<1x1x16xf32>
    tpu.vector_store %arg8[%c0_271, %c1_272, %c208_273], %273 {strides = array<i32>} : memref<1x3x256xf32, #tpu.memory_space<vmem>>, vector<1x1x16xf32>,
    %c0_274 = arith.constant 0 : index
    %c1_275 = arith.constant 1 : index
    %c224_276 = arith.constant 224 : index
    %274 = vector.load %arg8[%c0_274, %c1_275, %c224_276] : memref<1x3x256xf32, #tpu.memory_space<vmem>>, vector<1x1x16xf32>
    %275 = vector.shape_cast %274 : vector<1x1x16xf32> to vector<1x16xf32>
    %c1_277 = arith.constant 1 : index
    %c14_278 = arith.constant 14 : index
    %c0_279 = arith.constant 0 : index
    %276 = vector.load %arg9[%c1_277, %c14_278, %c0_279] : memref<3x16x16xf32, #tpu.memory_space<vmem>>, vector<1x1x16xf32>
    %277 = vector.shape_cast %276 : vector<1x1x16xf32> to vector<1x16xf32>
    %278 = arith.addf %275, %277 : vector<1x16xf32>
    %c0_280 = arith.constant 0 : index
    %c1_281 = arith.constant 1 : index
    %c224_282 = arith.constant 224 : index
    %279 = vector.load %arg8[%c0_280, %c1_281, %c224_282] : memref<1x3x256xf32, #tpu.memory_space<vmem>>, vector<1x1x16xf32>
    %280 = vector.shape_cast %279 : vector<1x1x16xf32> to vector<1x16xf32>
    %281 = vector.shape_cast %278 : vector<1x16xf32> to vector<1x1x16xf32>
    tpu.vector_store %arg8[%c0_280, %c1_281, %c224_282], %281 {strides = array<i32>} : memref<1x3x256xf32, #tpu.memory_space<vmem>>, vector<1x1x16xf32>,
    %c0_283 = arith.constant 0 : index
    %c1_284 = arith.constant 1 : index
    %c240_285 = arith.constant 240 : index
    %282 = vector.load %arg8[%c0_283, %c1_284, %c240_285] : memref<1x3x256xf32, #tpu.memory_space<vmem>>, vector<1x1x16xf32>
    %283 = vector.shape_cast %282 : vector<1x1x16xf32> to vector<1x16xf32>
    %c1_286 = arith.constant 1 : index
    %c15_287 = arith.constant 15 : index
    %c0_288 = arith.constant 0 : index
    %284 = vector.load %arg9[%c1_286, %c15_287, %c0_288] : memref<3x16x16xf32, #tpu.memory_space<vmem>>, vector<1x1x16xf32>
    %285 = vector.shape_cast %284 : vector<1x1x16xf32> to vector<1x16xf32>
    %286 = arith.addf %283, %285 : vector<1x16xf32>
    %c0_289 = arith.constant 0 : index
    %c1_290 = arith.constant 1 : index
    %c240_291 = arith.constant 240 : index
    %287 = vector.load %arg8[%c0_289, %c1_290, %c240_291] : memref<1x3x256xf32, #tpu.memory_space<vmem>>, vector<1x1x16xf32>
    %288 = vector.shape_cast %287 : vector<1x1x16xf32> to vector<1x16xf32>
    %289 = vector.shape_cast %286 : vector<1x16xf32> to vector<1x1x16xf32>
    tpu.vector_store %arg8[%c0_289, %c1_290, %c240_291], %289 {strides = array<i32>} : memref<1x3x256xf32, #tpu.memory_space<vmem>>, vector<1x1x16xf32>,
    %c0_292 = arith.constant 0 : index
    %c2_293 = arith.constant 2 : index
    %c0_294 = arith.constant 0 : index
    %290 = vector.load %arg8[%c0_292, %c2_293, %c0_294] : memref<1x3x256xf32, #tpu.memory_space<vmem>>, vector<1x1x16xf32>
    %291 = vector.shape_cast %290 : vector<1x1x16xf32> to vector<1x16xf32>
    %c2_295 = arith.constant 2 : index
    %c0_296 = arith.constant 0 : index
    %c0_297 = arith.constant 0 : index
    %292 = vector.load %arg9[%c2_295, %c0_296, %c0_297] : memref<3x16x16xf32, #tpu.memory_space<vmem>>, vector<1x1x16xf32>
    %293 = vector.shape_cast %292 : vector<1x1x16xf32> to vector<1x16xf32>
    %294 = arith.addf %291, %293 : vector<1x16xf32>
    %c0_298 = arith.constant 0 : index
    %c2_299 = arith.constant 2 : index
    %c0_300 = arith.constant 0 : index
    %295 = vector.load %arg8[%c0_298, %c2_299, %c0_300] : memref<1x3x256xf32, #tpu.memory_space<vmem>>, vector<1x1x16xf32>
    %296 = vector.shape_cast %295 : vector<1x1x16xf32> to vector<1x16xf32>
    %297 = vector.shape_cast %294 : vector<1x16xf32> to vector<1x1x16xf32>
    tpu.vector_store %arg8[%c0_298, %c2_299, %c0_300], %297 {strides = array<i32>} : memref<1x3x256xf32, #tpu.memory_space<vmem>>, vector<1x1x16xf32>,
    %c0_301 = arith.constant 0 : index
    %c2_302 = arith.constant 2 : index
    %c16_303 = arith.constant 16 : index
    %298 = vector.load %arg8[%c0_301, %c2_302, %c16_303] : memref<1x3x256xf32, #tpu.memory_space<vmem>>, vector<1x1x16xf32>
    %299 = vector.shape_cast %298 : vector<1x1x16xf32> to vector<1x16xf32>
    %c2_304 = arith.constant 2 : index
    %c1_305 = arith.constant 1 : index
    %c0_306 = arith.constant 0 : index
    %300 = vector.load %arg9[%c2_304, %c1_305, %c0_306] : memref<3x16x16xf32, #tpu.memory_space<vmem>>, vector<1x1x16xf32>
    %301 = vector.shape_cast %300 : vector<1x1x16xf32> to vector<1x16xf32>
    %302 = arith.addf %299, %301 : vector<1x16xf32>
    %c0_307 = arith.constant 0 : index
    %c2_308 = arith.constant 2 : index
    %c16_309 = arith.constant 16 : index
    %303 = vector.load %arg8[%c0_307, %c2_308, %c16_309] : memref<1x3x256xf32, #tpu.memory_space<vmem>>, vector<1x1x16xf32>
    %304 = vector.shape_cast %303 : vector<1x1x16xf32> to vector<1x16xf32>
    %305 = vector.shape_cast %302 : vector<1x16xf32> to vector<1x1x16xf32>
    tpu.vector_store %arg8[%c0_307, %c2_308, %c16_309], %305 {strides = array<i32>} : memref<1x3x256xf32, #tpu.memory_space<vmem>>, vector<1x1x16xf32>,
    %c0_310 = arith.constant 0 : index
    %c2_311 = arith.constant 2 : index
    %c32_312 = arith.constant 32 : index
    %306 = vector.load %arg8[%c0_310, %c2_311, %c32_312] : memref<1x3x256xf32, #tpu.memory_space<vmem>>, vector<1x1x16xf32>
    %307 = vector.shape_cast %306 : vector<1x1x16xf32> to vector<1x16xf32>
    %c2_313 = arith.constant 2 : index
    %c2_314 = arith.constant 2 : index
    %c0_315 = arith.constant 0 : index
    %308 = vector.load %arg9[%c2_313, %c2_314, %c0_315] : memref<3x16x16xf32, #tpu.memory_space<vmem>>, vector<1x1x16xf32>
    %309 = vector.shape_cast %308 : vector<1x1x16xf32> to vector<1x16xf32>
    %310 = arith.addf %307, %309 : vector<1x16xf32>
    %c0_316 = arith.constant 0 : index
    %c2_317 = arith.constant 2 : index
    %c32_318 = arith.constant 32 : index
    %311 = vector.load %arg8[%c0_316, %c2_317, %c32_318] : memref<1x3x256xf32, #tpu.memory_space<vmem>>, vector<1x1x16xf32>
    %312 = vector.shape_cast %311 : vector<1x1x16xf32> to vector<1x16xf32>
    %313 = vector.shape_cast %310 : vector<1x16xf32> to vector<1x1x16xf32>
    tpu.vector_store %arg8[%c0_316, %c2_317, %c32_318], %313 {strides = array<i32>} : memref<1x3x256xf32, #tpu.memory_space<vmem>>, vector<1x1x16xf32>,
    %c0_319 = arith.constant 0 : index
    %c2_320 = arith.constant 2 : index
    %c48_321 = arith.constant 48 : index
    %314 = vector.load %arg8[%c0_319, %c2_320, %c48_321] : memref<1x3x256xf32, #tpu.memory_space<vmem>>, vector<1x1x16xf32>
    %315 = vector.shape_cast %314 : vector<1x1x16xf32> to vector<1x16xf32>
    %c2_322 = arith.constant 2 : index
    %c3_323 = arith.constant 3 : index
    %c0_324 = arith.constant 0 : index
    %316 = vector.load %arg9[%c2_322, %c3_323, %c0_324] : memref<3x16x16xf32, #tpu.memory_space<vmem>>, vector<1x1x16xf32>
    %317 = vector.shape_cast %316 : vector<1x1x16xf32> to vector<1x16xf32>
    %318 = arith.addf %315, %317 : vector<1x16xf32>
    %c0_325 = arith.constant 0 : index
    %c2_326 = arith.constant 2 : index
    %c48_327 = arith.constant 48 : index
    %319 = vector.load %arg8[%c0_325, %c2_326, %c48_327] : memref<1x3x256xf32, #tpu.memory_space<vmem>>, vector<1x1x16xf32>
    %320 = vector.shape_cast %319 : vector<1x1x16xf32> to vector<1x16xf32>
    %321 = vector.shape_cast %318 : vector<1x16xf32> to vector<1x1x16xf32>
    tpu.vector_store %arg8[%c0_325, %c2_326, %c48_327], %321 {strides = array<i32>} : memref<1x3x256xf32, #tpu.memory_space<vmem>>, vector<1x1x16xf32>,
    %c0_328 = arith.constant 0 : index
    %c2_329 = arith.constant 2 : index
    %c64_330 = arith.constant 64 : index
    %322 = vector.load %arg8[%c0_328, %c2_329, %c64_330] : memref<1x3x256xf32, #tpu.memory_space<vmem>>, vector<1x1x16xf32>
    %323 = vector.shape_cast %322 : vector<1x1x16xf32> to vector<1x16xf32>
    %c2_331 = arith.constant 2 : index
    %c4_332 = arith.constant 4 : index
    %c0_333 = arith.constant 0 : index
    %324 = vector.load %arg9[%c2_331, %c4_332, %c0_333] : memref<3x16x16xf32, #tpu.memory_space<vmem>>, vector<1x1x16xf32>
    %325 = vector.shape_cast %324 : vector<1x1x16xf32> to vector<1x16xf32>
    %326 = arith.addf %323, %325 : vector<1x16xf32>
    %c0_334 = arith.constant 0 : index
    %c2_335 = arith.constant 2 : index
    %c64_336 = arith.constant 64 : index
    %327 = vector.load %arg8[%c0_334, %c2_335, %c64_336] : memref<1x3x256xf32, #tpu.memory_space<vmem>>, vector<1x1x16xf32>
    %328 = vector.shape_cast %327 : vector<1x1x16xf32> to vector<1x16xf32>
    %329 = vector.shape_cast %326 : vector<1x16xf32> to vector<1x1x16xf32>
    tpu.vector_store %arg8[%c0_334, %c2_335, %c64_336], %329 {strides = array<i32>} : memref<1x3x256xf32, #tpu.memory_space<vmem>>, vector<1x1x16xf32>,
    %c0_337 = arith.constant 0 : index
    %c2_338 = arith.constant 2 : index
    %c80_339 = arith.constant 80 : index
    %330 = vector.load %arg8[%c0_337, %c2_338, %c80_339] : memref<1x3x256xf32, #tpu.memory_space<vmem>>, vector<1x1x16xf32>
    %331 = vector.shape_cast %330 : vector<1x1x16xf32> to vector<1x16xf32>
    %c2_340 = arith.constant 2 : index
    %c5_341 = arith.constant 5 : index
    %c0_342 = arith.constant 0 : index
    %332 = vector.load %arg9[%c2_340, %c5_341, %c0_342] : memref<3x16x16xf32, #tpu.memory_space<vmem>>, vector<1x1x16xf32>
    %333 = vector.shape_cast %332 : vector<1x1x16xf32> to vector<1x16xf32>
    %334 = arith.addf %331, %333 : vector<1x16xf32>
    %c0_343 = arith.constant 0 : index
    %c2_344 = arith.constant 2 : index
    %c80_345 = arith.constant 80 : index
    %335 = vector.load %arg8[%c0_343, %c2_344, %c80_345] : memref<1x3x256xf32, #tpu.memory_space<vmem>>, vector<1x1x16xf32>
    %336 = vector.shape_cast %335 : vector<1x1x16xf32> to vector<1x16xf32>
    %337 = vector.shape_cast %334 : vector<1x16xf32> to vector<1x1x16xf32>
    tpu.vector_store %arg8[%c0_343, %c2_344, %c80_345], %337 {strides = array<i32>} : memref<1x3x256xf32, #tpu.memory_space<vmem>>, vector<1x1x16xf32>,
    %c0_346 = arith.constant 0 : index
    %c2_347 = arith.constant 2 : index
    %c96_348 = arith.constant 96 : index
    %338 = vector.load %arg8[%c0_346, %c2_347, %c96_348] : memref<1x3x256xf32, #tpu.memory_space<vmem>>, vector<1x1x16xf32>
    %339 = vector.shape_cast %338 : vector<1x1x16xf32> to vector<1x16xf32>
    %c2_349 = arith.constant 2 : index
    %c6_350 = arith.constant 6 : index
    %c0_351 = arith.constant 0 : index
    %340 = vector.load %arg9[%c2_349, %c6_350, %c0_351] : memref<3x16x16xf32, #tpu.memory_space<vmem>>, vector<1x1x16xf32>
    %341 = vector.shape_cast %340 : vector<1x1x16xf32> to vector<1x16xf32>
    %342 = arith.addf %339, %341 : vector<1x16xf32>
    %c0_352 = arith.constant 0 : index
    %c2_353 = arith.constant 2 : index
    %c96_354 = arith.constant 96 : index
    %343 = vector.load %arg8[%c0_352, %c2_353, %c96_354] : memref<1x3x256xf32, #tpu.memory_space<vmem>>, vector<1x1x16xf32>
    %344 = vector.shape_cast %343 : vector<1x1x16xf32> to vector<1x16xf32>
    %345 = vector.shape_cast %342 : vector<1x16xf32> to vector<1x1x16xf32>
    tpu.vector_store %arg8[%c0_352, %c2_353, %c96_354], %345 {strides = array<i32>} : memref<1x3x256xf32, #tpu.memory_space<vmem>>, vector<1x1x16xf32>,
    %c0_355 = arith.constant 0 : index
    %c2_356 = arith.constant 2 : index
    %c112_357 = arith.constant 112 : index
    %346 = vector.load %arg8[%c0_355, %c2_356, %c112_357] : memref<1x3x256xf32, #tpu.memory_space<vmem>>, vector<1x1x16xf32>
    %347 = vector.shape_cast %346 : vector<1x1x16xf32> to vector<1x16xf32>
    %c2_358 = arith.constant 2 : index
    %c7_359 = arith.constant 7 : index
    %c0_360 = arith.constant 0 : index
    %348 = vector.load %arg9[%c2_358, %c7_359, %c0_360] : memref<3x16x16xf32, #tpu.memory_space<vmem>>, vector<1x1x16xf32>
    %349 = vector.shape_cast %348 : vector<1x1x16xf32> to vector<1x16xf32>
    %350 = arith.addf %347, %349 : vector<1x16xf32>
    %c0_361 = arith.constant 0 : index
    %c2_362 = arith.constant 2 : index
    %c112_363 = arith.constant 112 : index
    %351 = vector.load %arg8[%c0_361, %c2_362, %c112_363] : memref<1x3x256xf32, #tpu.memory_space<vmem>>, vector<1x1x16xf32>
    %352 = vector.shape_cast %351 : vector<1x1x16xf32> to vector<1x16xf32>
    %353 = vector.shape_cast %350 : vector<1x16xf32> to vector<1x1x16xf32>
    tpu.vector_store %arg8[%c0_361, %c2_362, %c112_363], %353 {strides = array<i32>} : memref<1x3x256xf32, #tpu.memory_space<vmem>>, vector<1x1x16xf32>,
    %c0_364 = arith.constant 0 : index
    %c2_365 = arith.constant 2 : index
    %c128_366 = arith.constant 128 : index
    %354 = vector.load %arg8[%c0_364, %c2_365, %c128_366] : memref<1x3x256xf32, #tpu.memory_space<vmem>>, vector<1x1x16xf32>
    %355 = vector.shape_cast %354 : vector<1x1x16xf32> to vector<1x16xf32>
    %c2_367 = arith.constant 2 : index
    %c8_368 = arith.constant 8 : index
    %c0_369 = arith.constant 0 : index
    %356 = vector.load %arg9[%c2_367, %c8_368, %c0_369] : memref<3x16x16xf32, #tpu.memory_space<vmem>>, vector<1x1x16xf32>
    %357 = vector.shape_cast %356 : vector<1x1x16xf32> to vector<1x16xf32>
    %358 = arith.addf %355, %357 : vector<1x16xf32>
    %c0_370 = arith.constant 0 : index
    %c2_371 = arith.constant 2 : index
    %c128_372 = arith.constant 128 : index
    %359 = vector.load %arg8[%c0_370, %c2_371, %c128_372] : memref<1x3x256xf32, #tpu.memory_space<vmem>>, vector<1x1x16xf32>
    %360 = vector.shape_cast %359 : vector<1x1x16xf32> to vector<1x16xf32>
    %361 = vector.shape_cast %358 : vector<1x16xf32> to vector<1x1x16xf32>
    tpu.vector_store %arg8[%c0_370, %c2_371, %c128_372], %361 {strides = array<i32>} : memref<1x3x256xf32, #tpu.memory_space<vmem>>, vector<1x1x16xf32>,
    %c0_373 = arith.constant 0 : index
    %c2_374 = arith.constant 2 : index
    %c144_375 = arith.constant 144 : index
    %362 = vector.load %arg8[%c0_373, %c2_374, %c144_375] : memref<1x3x256xf32, #tpu.memory_space<vmem>>, vector<1x1x16xf32>
    %363 = vector.shape_cast %362 : vector<1x1x16xf32> to vector<1x16xf32>
    %c2_376 = arith.constant 2 : index
    %c9_377 = arith.constant 9 : index
    %c0_378 = arith.constant 0 : index
    %364 = vector.load %arg9[%c2_376, %c9_377, %c0_378] : memref<3x16x16xf32, #tpu.memory_space<vmem>>, vector<1x1x16xf32>
    %365 = vector.shape_cast %364 : vector<1x1x16xf32> to vector<1x16xf32>
    %366 = arith.addf %363, %365 : vector<1x16xf32>
    %c0_379 = arith.constant 0 : index
    %c2_380 = arith.constant 2 : index
    %c144_381 = arith.constant 144 : index
    %367 = vector.load %arg8[%c0_379, %c2_380, %c144_381] : memref<1x3x256xf32, #tpu.memory_space<vmem>>, vector<1x1x16xf32>
    %368 = vector.shape_cast %367 : vector<1x1x16xf32> to vector<1x16xf32>
    %369 = vector.shape_cast %366 : vector<1x16xf32> to vector<1x1x16xf32>
    tpu.vector_store %arg8[%c0_379, %c2_380, %c144_381], %369 {strides = array<i32>} : memref<1x3x256xf32, #tpu.memory_space<vmem>>, vector<1x1x16xf32>,
    %c0_382 = arith.constant 0 : index
    %c2_383 = arith.constant 2 : index
    %c160_384 = arith.constant 160 : index
    %370 = vector.load %arg8[%c0_382, %c2_383, %c160_384] : memref<1x3x256xf32, #tpu.memory_space<vmem>>, vector<1x1x16xf32>
    %371 = vector.shape_cast %370 : vector<1x1x16xf32> to vector<1x16xf32>
    %c2_385 = arith.constant 2 : index
    %c10_386 = arith.constant 10 : index
    %c0_387 = arith.constant 0 : index
    %372 = vector.load %arg9[%c2_385, %c10_386, %c0_387] : memref<3x16x16xf32, #tpu.memory_space<vmem>>, vector<1x1x16xf32>
    %373 = vector.shape_cast %372 : vector<1x1x16xf32> to vector<1x16xf32>
    %374 = arith.addf %371, %373 : vector<1x16xf32>
    %c0_388 = arith.constant 0 : index
    %c2_389 = arith.constant 2 : index
    %c160_390 = arith.constant 160 : index
    %375 = vector.load %arg8[%c0_388, %c2_389, %c160_390] : memref<1x3x256xf32, #tpu.memory_space<vmem>>, vector<1x1x16xf32>
    %376 = vector.shape_cast %375 : vector<1x1x16xf32> to vector<1x16xf32>
    %377 = vector.shape_cast %374 : vector<1x16xf32> to vector<1x1x16xf32>
    tpu.vector_store %arg8[%c0_388, %c2_389, %c160_390], %377 {strides = array<i32>} : memref<1x3x256xf32, #tpu.memory_space<vmem>>, vector<1x1x16xf32>,
    %c0_391 = arith.constant 0 : index
    %c2_392 = arith.constant 2 : index
    %c176_393 = arith.constant 176 : index
    %378 = vector.load %arg8[%c0_391, %c2_392, %c176_393] : memref<1x3x256xf32, #tpu.memory_space<vmem>>, vector<1x1x16xf32>
    %379 = vector.shape_cast %378 : vector<1x1x16xf32> to vector<1x16xf32>
    %c2_394 = arith.constant 2 : index
    %c11_395 = arith.constant 11 : index
    %c0_396 = arith.constant 0 : index
    %380 = vector.load %arg9[%c2_394, %c11_395, %c0_396] : memref<3x16x16xf32, #tpu.memory_space<vmem>>, vector<1x1x16xf32>
    %381 = vector.shape_cast %380 : vector<1x1x16xf32> to vector<1x16xf32>
    %382 = arith.addf %379, %381 : vector<1x16xf32>
    %c0_397 = arith.constant 0 : index
    %c2_398 = arith.constant 2 : index
    %c176_399 = arith.constant 176 : index
    %383 = vector.load %arg8[%c0_397, %c2_398, %c176_399] : memref<1x3x256xf32, #tpu.memory_space<vmem>>, vector<1x1x16xf32>
    %384 = vector.shape_cast %383 : vector<1x1x16xf32> to vector<1x16xf32>
    %385 = vector.shape_cast %382 : vector<1x16xf32> to vector<1x1x16xf32>
    tpu.vector_store %arg8[%c0_397, %c2_398, %c176_399], %385 {strides = array<i32>} : memref<1x3x256xf32, #tpu.memory_space<vmem>>, vector<1x1x16xf32>,
    %c0_400 = arith.constant 0 : index
    %c2_401 = arith.constant 2 : index
    %c192_402 = arith.constant 192 : index
    %386 = vector.load %arg8[%c0_400, %c2_401, %c192_402] : memref<1x3x256xf32, #tpu.memory_space<vmem>>, vector<1x1x16xf32>
    %387 = vector.shape_cast %386 : vector<1x1x16xf32> to vector<1x16xf32>
    %c2_403 = arith.constant 2 : index
    %c12_404 = arith.constant 12 : index
    %c0_405 = arith.constant 0 : index
    %388 = vector.load %arg9[%c2_403, %c12_404, %c0_405] : memref<3x16x16xf32, #tpu.memory_space<vmem>>, vector<1x1x16xf32>
    %389 = vector.shape_cast %388 : vector<1x1x16xf32> to vector<1x16xf32>
    %390 = arith.addf %387, %389 : vector<1x16xf32>
    %c0_406 = arith.constant 0 : index
    %c2_407 = arith.constant 2 : index
    %c192_408 = arith.constant 192 : index
    %391 = vector.load %arg8[%c0_406, %c2_407, %c192_408] : memref<1x3x256xf32, #tpu.memory_space<vmem>>, vector<1x1x16xf32>
    %392 = vector.shape_cast %391 : vector<1x1x16xf32> to vector<1x16xf32>
    %393 = vector.shape_cast %390 : vector<1x16xf32> to vector<1x1x16xf32>
    tpu.vector_store %arg8[%c0_406, %c2_407, %c192_408], %393 {strides = array<i32>} : memref<1x3x256xf32, #tpu.memory_space<vmem>>, vector<1x1x16xf32>,
    %c0_409 = arith.constant 0 : index
    %c2_410 = arith.constant 2 : index
    %c208_411 = arith.constant 208 : index
    %394 = vector.load %arg8[%c0_409, %c2_410, %c208_411] : memref<1x3x256xf32, #tpu.memory_space<vmem>>, vector<1x1x16xf32>
    %395 = vector.shape_cast %394 : vector<1x1x16xf32> to vector<1x16xf32>
    %c2_412 = arith.constant 2 : index
    %c13_413 = arith.constant 13 : index
    %c0_414 = arith.constant 0 : index
    %396 = vector.load %arg9[%c2_412, %c13_413, %c0_414] : memref<3x16x16xf32, #tpu.memory_space<vmem>>, vector<1x1x16xf32>
    %397 = vector.shape_cast %396 : vector<1x1x16xf32> to vector<1x16xf32>
    %398 = arith.addf %395, %397 : vector<1x16xf32>
    %c0_415 = arith.constant 0 : index
    %c2_416 = arith.constant 2 : index
    %c208_417 = arith.constant 208 : index
    %399 = vector.load %arg8[%c0_415, %c2_416, %c208_417] : memref<1x3x256xf32, #tpu.memory_space<vmem>>, vector<1x1x16xf32>
    %400 = vector.shape_cast %399 : vector<1x1x16xf32> to vector<1x16xf32>
    %401 = vector.shape_cast %398 : vector<1x16xf32> to vector<1x1x16xf32>
    tpu.vector_store %arg8[%c0_415, %c2_416, %c208_417], %401 {strides = array<i32>} : memref<1x3x256xf32, #tpu.memory_space<vmem>>, vector<1x1x16xf32>,
    %c0_418 = arith.constant 0 : index
    %c2_419 = arith.constant 2 : index
    %c224_420 = arith.constant 224 : index
    %402 = vector.load %arg8[%c0_418, %c2_419, %c224_420] : memref<1x3x256xf32, #tpu.memory_space<vmem>>, vector<1x1x16xf32>
    %403 = vector.shape_cast %402 : vector<1x1x16xf32> to vector<1x16xf32>
    %c2_421 = arith.constant 2 : index
    %c14_422 = arith.constant 14 : index
    %c0_423 = arith.constant 0 : index
    %404 = vector.load %arg9[%c2_421, %c14_422, %c0_423] : memref<3x16x16xf32, #tpu.memory_space<vmem>>, vector<1x1x16xf32>
    %405 = vector.shape_cast %404 : vector<1x1x16xf32> to vector<1x16xf32>
    %406 = arith.addf %403, %405 : vector<1x16xf32>
    %c0_424 = arith.constant 0 : index
    %c2_425 = arith.constant 2 : index
    %c224_426 = arith.constant 224 : index
    %407 = vector.load %arg8[%c0_424, %c2_425, %c224_426] : memref<1x3x256xf32, #tpu.memory_space<vmem>>, vector<1x1x16xf32>
    %408 = vector.shape_cast %407 : vector<1x1x16xf32> to vector<1x16xf32>
    %409 = vector.shape_cast %406 : vector<1x16xf32> to vector<1x1x16xf32>
    tpu.vector_store %arg8[%c0_424, %c2_425, %c224_426], %409 {strides = array<i32>} : memref<1x3x256xf32, #tpu.memory_space<vmem>>, vector<1x1x16xf32>,
    %c0_427 = arith.constant 0 : index
    %c2_428 = arith.constant 2 : index
    %c240_429 = arith.constant 240 : index
    %410 = vector.load %arg8[%c0_427, %c2_428, %c240_429] : memref<1x3x256xf32, #tpu.memory_space<vmem>>, vector<1x1x16xf32>
    %411 = vector.shape_cast %410 : vector<1x1x16xf32> to vector<1x16xf32>
    %c2_430 = arith.constant 2 : index
    %c15_431 = arith.constant 15 : index
    %c0_432 = arith.constant 0 : index
    %412 = vector.load %arg9[%c2_430, %c15_431, %c0_432] : memref<3x16x16xf32, #tpu.memory_space<vmem>>, vector<1x1x16xf32>
    %413 = vector.shape_cast %412 : vector<1x1x16xf32> to vector<1x16xf32>
    %414 = arith.addf %411, %413 : vector<1x16xf32>
    %c0_433 = arith.constant 0 : index
    %c2_434 = arith.constant 2 : index
    %c240_435 = arith.constant 240 : index
    %415 = vector.load %arg8[%c0_433, %c2_434, %c240_435] : memref<1x3x256xf32, #tpu.memory_space<vmem>>, vector<1x1x16xf32>
    %416 = vector.shape_cast %415 : vector<1x1x16xf32> to vector<1x16xf32>
    %417 = vector.shape_cast %414 : vector<1x16xf32> to vector<1x1x16xf32>
    tpu.vector_store %arg8[%c0_433, %c2_434, %c240_435], %417 {strides = array<i32>} : memref<1x3x256xf32, #tpu.memory_space<vmem>>, vector<1x1x16xf32>,
    return
  }
  func.func @transform_0(%arg0: i32, %arg1: i32) -> (i32, i32, i32) {
    %c0_i32 = arith.constant 0 : i32
    %c0_i32_0 = arith.constant 0 : i32
    %c0_i32_1 = arith.constant 0 : i32
    return %arg0, %c0_i32, %c0_i32_0 : i32, i32, i32
  }
  func.func @transform_1(%arg0: i32, %arg1: i32) -> (i32, i32) {
    %c0_i32 = arith.constant 0 : i32
    %c0_i32_0 = arith.constant 0 : i32
    %c0_i32_1 = arith.constant 0 : i32
    return %c0_i32, %c0_i32_0 : i32, i32
  }
  func.func @transform_2(%arg0: i32, %arg1: i32) -> (i32, i32, i32) {
    %c0_i32 = arith.constant 0 : i32
    %c0_i32_0 = arith.constant 0 : i32
    return %arg0, %c0_i32, %arg1 : i32, i32, i32
  }
  func.func @transform_3(%arg0: i32, %arg1: i32) -> (i32, i32, i32) {
    %c0_i32 = arith.constant 0 : i32
    %c0_i32_0 = arith.constant 0 : i32
    %c0_i32_1 = arith.constant 0 : i32
    return %arg0, %c0_i32, %c0_i32_0 : i32, i32, i32
  }
  func.func @transform_4(%arg0: i32, %arg1: i32) -> (i32, i32) {
    %c0_i32 = arith.constant 0 : i32
    %c0_i32_0 = arith.constant 0 : i32
    return %arg1, %c0_i32 : i32, i32
  }
  func.func @transform_5(%arg0: i32, %arg1: i32) -> (i32, i32) {
    %c0_i32 = arith.constant 0 : i32
    %c0_i32_0 = arith.constant 0 : i32
    %c0_i32_1 = arith.constant 0 : i32
    return %c0_i32, %c0_i32_0 : i32, i32
  }
  func.func @transform_6(%arg0: i32, %arg1: i32) -> (i32, i32, i32) {
    %c0_i32 = arith.constant 0 : i32
    %c0_i32_0 = arith.constant 0 : i32
    return %arg0, %c0_i32, %arg1 : i32, i32, i32
  }
}

</mosaic_0001>

<llo_original>
// kernel: tpu_custom_call.1
$region0: #{tpu_custom_call.1}
  #allocation0 [shape = 'u32[]', space=smem, size = 0x4, offset = 0x4, fixed_abs, tag = 'smem constant byte address 0x4 - core index']
  #allocation1 [shape = 'u32[72,128]{1,0:T(1,128)}', space=vmem, size = 0x9000, scoped, tag = 'internal scratch']
  #allocation2 [shape = 'f32[3,16,16]{2,1,0:T(8,128)}', space=vmem, size = 0x6000, scoped, tag = 'scratch operand']
  %s0 = inlined_call_operand.vmem [shape: bf16[2,3,64], index: 0, kind: input, shape index: {}]
  %s1 = inlined_call_operand.vmem [shape: f32[3,1], index: 1, kind: input, shape index: {}]
  %s2 = inlined_call_operand.hbm [shape: bf16[2,64,256], index: 2, kind: input, shape index: {}]
  %s3 = inlined_call_operand.vmem [shape: bf16[2,8,24], index: 3, kind: input, shape index: {}]
  %s4 = inlined_call_operand.vmem [shape: f32[16,8], index: 4, kind: input, shape index: {}]
  %s5 = inlined_call_operand.vmem [shape: f32[8,16], index: 5, kind: input, shape index: {}]
  %s6 = inlined_call_operand.vmem [shape: f32[2,3,256], index: 6, kind: output, shape index: {}]
  %s7 = sld [smem:[#allocation0]]
  $region61: #{tpu_custom_call.1} parent=0
    _
  %s9 = ssub.s32 1, %s7
  %s10 = scalar_select 0, %s9, %s7
  $region1: #{tpu_custom_call.1} parent=0
    #allocation3 [shape = 'u8[65536]{0}', space=vmem, size = 0x10000, scoped, tag = 'input window, operand 2']
    #allocation4 [shape = 's32[2]{0}', space=sflag, size = 0x8, scoped, tag = 'scoped memory for tpu_custom_call.1']
    %11 = vsyncpa [#allocation4], 0
    %s12 = scalar_lea.sflag [#allocation4], 1
    %13 = vsyncpa %s12, 0
    loop: start=0, step=1, limit=4
    $region2: #{tpu_custom_call.1} parent=1 // loop_pre_header
      _
    $region3: #{tpu_custom_call.1} parent=1 // loop_header
      %s15 = sphi 0, %s19
      %p16 = scmp.ge.s32.totalorder %s15, 4
      %s22 = sphi 0, %s34
      %s23 = sphi 0, %s30
      %s24 = sphi 0, %s22
      %s25 = sphi 0, %s23
      %s26 = sphi 0, %s24
      %s27 = sphi 0, %s25
      %s37 = sphi 0, %s39
      %s40 = sphi 0, %s37
      %s41 = sphi 0, %s40
      %s57 = sphi 0, %s41
      %s61 = sphi 0, %s61
      %s63 = sphi 0, %s61
      %s64 = sphi 0, %s63
      %s78 = sphi 0, %s64
      %s86 = sphi 0, %s88
      %s89 = sphi 0, %s86
      %s90 = sphi 0, %s89
      %s106 = sphi 0, %s90
      %s112 = sphi 0, %s114
      %s115 = sphi 0, %s112
      %s116 = sphi 0, %s115
      %s132 = sphi 0, %s116
      %s138 = sphi 0, %s140
      %s141 = sphi 0, %s138
      %s142 = sphi 0, %s141
      %s158 = sphi 0, %s142
      %s162 = sphi 0, %s162
      %s164 = sphi 0, %s162
      %s165 = sphi 0, %s164
      %s179 = sphi 0, %s165
      %s187 = sphi 0, %s189
      %s190 = sphi 0, %s187
      %s191 = sphi 0, %s190
      %s207 = sphi 0, %s191
    $region4: #{tpu_custom_call.1} parent=1 // loop_header_branch
      %18 = sbr.rel (%p16) target = $region8
    $region5: #{tpu_custom_call.1} parent=1 // loop_body
      %s20 = ssub.s32 %s15, 1
      %s21 = ssub.s32 %s15, 2
      %s28 = sadd.s32 1, %s23
      %p29 = scmp.ge.s32.totalorder %s28, 1
      %s30 = scalar_select %p29, 0, %s28
      %s31 = sadd.s32 1, %s22
      %s32 = scalar_select %p29, %s31, %s22
      %p33 = scmp.ge.s32.totalorder %s32, 2
      %s34 = scalar_select %p33, 0, %s32
      %s35 = ssub.s32 %s22, %s34
      %p36 = scmp.eq.s32.totalorder %s35, 0
      %s38 = sadd.s32 %s37, 1
      %s39 = scalar_select %p36, %s37, %s38
      %p42 = pneg %p36
      %p43 = scmp.eq.s32.totalorder %s15, 1
      %p44 = por %p42, %p43
      %p45 = scmp.ne.s32.totalorder %s37, %s40
      %p46 = scmp.eq.s32.totalorder %s15, 0
      %p47 = por %p45, %p46
      %p48 = scmp.ne.s32.totalorder %s37, %s40
      %p49 = scmp.eq.s32.totalorder %s20, 1
      %p50 = por %p48, %p49
      %p51 = scmp.ne.s32.totalorder %s40, %s41
      %p52 = scmp.eq.s32.totalorder %s20, 0
      %p53 = por %p51, %p52
      %p54 = scmp.ne.s32.totalorder %s40, %s41
      %p55 = scmp.eq.s32.totalorder %s21, 1
      %p56 = por %p54, %p55
      %p58 = scmp.ne.s32.totalorder %s41, %s57
      %p59 = scmp.eq.s32.totalorder %s21, 0
      %p60 = por %p58, %p59
      %s62 = sadd.s32 %s61, 1
      %p65 = scmp.eq.s32.totalorder %s15, 1
      %p66 = scmp.ne.s32.totalorder %s61, %s63
      %p67 = scmp.eq.s32.totalorder %s15, 0
      %p68 = por %p66, %p67
      %p69 = scmp.ne.s32.totalorder %s61, %s63
      %p70 = scmp.eq.s32.totalorder %s20, 1
      %p71 = por %p69, %p70
      %p72 = scmp.ne.s32.totalorder %s63, %s64
      %p73 = scmp.eq.s32.totalorder %s20, 0
      %p74 = por %p72, %p73
      %p75 = scmp.ne.s32.totalorder %s63, %s64
      %p76 = scmp.eq.s32.totalorder %s21, 1
      %p77 = por %p75, %p76
      %p79 = scmp.ne.s32.totalorder %s64, %s78
      %p80 = scmp.eq.s32.totalorder %s21, 0
      %p81 = por %p79, %p80
      %s82 = ssub.s32 %s22, %s34
      %s83 = ssub.s32 %s23, %s30
      %s84 = sor.u32 %s82, %s83
      %p85 = scmp.eq.s32.totalorder %s84, 0
      %s87 = sadd.s32 %s86, 1
      %s88 = scalar_select %p85, %s86, %s87
      %p91 = pneg %p85
      %p92 = scmp.eq.s32.totalorder %s15, 1
      %p93 = por %p91, %p92
      %p94 = scmp.ne.s32.totalorder %s86, %s89
      %p95 = scmp.eq.s32.totalorder %s15, 0
      %p96 = por %p94, %p95
      %p97 = scmp.ne.s32.totalorder %s86, %s89
      %p98 = scmp.eq.s32.totalorder %s20, 1
      %p99 = por %p97, %p98
      %p100 = scmp.ne.s32.totalorder %s89, %s90
      %p101 = scmp.eq.s32.totalorder %s20, 0
      %p102 = por %p100, %p101
      %p103 = scmp.ne.s32.totalorder %s89, %s90
      %p104 = scmp.eq.s32.totalorder %s21, 1
      %p105 = por %p103, %p104
      %p107 = scmp.ne.s32.totalorder %s90, %s106
      %p108 = scmp.eq.s32.totalorder %s21, 0
      %p109 = por %p107, %p108
      %s110 = ssub.s32 %s22, %s34
      %p111 = scmp.eq.s32.totalorder %s110, 0
      %s113 = sadd.s32 %s112, 1
      %s114 = scalar_select %p111, %s112, %s113
      %p117 = pneg %p111
      %p118 = scmp.eq.s32.totalorder %s15, 1
      %p119 = por %p117, %p118
      %p120 = scmp.ne.s32.totalorder %s112, %s115
      %p121 = scmp.eq.s32.totalorder %s15, 0
      %p122 = por %p120, %p121
      %p123 = scmp.ne.s32.totalorder %s112, %s115
      %p124 = scmp.eq.s32.totalorder %s20, 1
      %p125 = por %p123, %p124
      %p126 = scmp.ne.s32.totalorder %s115, %s116
      %p127 = scmp.eq.s32.totalorder %s20, 0
      %p128 = por %p126, %p127
      %p129 = scmp.ne.s32.totalorder %s115, %s116
      %p130 = scmp.eq.s32.totalorder %s21, 1
      %p131 = por %p129, %p130
      %p133 = scmp.ne.s32.totalorder %s116, %s132
      %p134 = scmp.eq.s32.totalorder %s21, 0
      %p135 = por %p133, %p134
      %s136 = ssub.s32 %s23, %s30
      %p137 = scmp.eq.s32.totalorder %s136, 0
      %s139 = sadd.s32 %s138, 1
      %s140 = scalar_select %p137, %s138, %s139
      %p143 = pneg %p137
      %p144 = scmp.eq.s32.totalorder %s15, 1
      %p145 = por %p143, %p144
      %p146 = scmp.ne.s32.totalorder %s138, %s141
      %p147 = scmp.eq.s32.totalorder %s15, 0
      %p148 = por %p146, %p147
      %p149 = scmp.ne.s32.totalorder %s138, %s141
      %p150 = scmp.eq.s32.totalorder %s20, 1
      %p151 = por %p149, %p150
      %p152 = scmp.ne.s32.totalorder %s141, %s142
      %p153 = scmp.eq.s32.totalorder %s20, 0
      %p154 = por %p152, %p153
      %p155 = scmp.ne.s32.totalorder %s141, %s142
      %p156 = scmp.eq.s32.totalorder %s21, 1
      %p157 = por %p155, %p156
      %p159 = scmp.ne.s32.totalorder %s142, %s158
      %p160 = scmp.eq.s32.totalorder %s21, 0
      %p161 = por %p159, %p160
      %s163 = sadd.s32 %s162, 1
      %p166 = scmp.eq.s32.totalorder %s15, 1
      %p167 = scmp.ne.s32.totalorder %s162, %s164
      %p168 = scmp.eq.s32.totalorder %s15, 0
      %p169 = por %p167, %p168
      %p170 = scmp.ne.s32.totalorder %s162, %s164
      %p171 = scmp.eq.s32.totalorder %s20, 1
      %p172 = por %p170, %p171
      %p173 = scmp.ne.s32.totalorder %s164, %s165
      %p174 = scmp.eq.s32.totalorder %s20, 0
      %p175 = por %p173, %p174
      %p176 = scmp.ne.s32.totalorder %s164, %s165
      %p177 = scmp.eq.s32.totalorder %s21, 1
      %p178 = por %p176, %p177
      %p180 = scmp.ne.s32.totalorder %s165, %s179
      %p181 = scmp.eq.s32.totalorder %s21, 0
      %p182 = por %p180, %p181
      %s183 = ssub.s32 %s22, %s34
      %s184 = ssub.s32 %s23, %s30
      %s185 = sor.u32 %s183, %s184
      %p186 = scmp.eq.s32.totalorder %s185, 0
      %s188 = sadd.s32 %s187, 1
      %s189 = scalar_select %p186, %s187, %s188
      %p192 = pneg %p186
      %p193 = scmp.eq.s32.totalorder %s15, 1
      %p194 = por %p192, %p193
      %p195 = scmp.ne.s32.totalorder %s187, %s190
      %p196 = scmp.eq.s32.totalorder %s15, 0
      %p197 = por %p195, %p196
      %p198 = scmp.ne.s32.totalorder %s187, %s190
      %p199 = scmp.eq.s32.totalorder %s20, 1
      %p200 = por %p198, %p199
      %p201 = scmp.ne.s32.totalorder %s190, %s191
      %p202 = scmp.eq.s32.totalorder %s20, 0
      %p203 = por %p201, %p202
      %p204 = scmp.ne.s32.totalorder %s190, %s191
      %p205 = scmp.eq.s32.totalorder %s21, 1
      %p206 = por %p204, %p205
      %p208 = scmp.ne.s32.totalorder %s191, %s207
      %p209 = scmp.eq.s32.totalorder %s21, 0
      %p210 = por %p208, %p209
      %p211 = scmp.le.s32.totalorder 1, %s15
      %p212 = scmp.lt.s32.totalorder %s15, 3
      %p213 = pnand %p211, %p212
      %p214 = pneg %p213
      // Predicated region
      $region9: #{tpu_custom_call.1} parent=5 // pred_check
        _
      $region10: #{tpu_custom_call.1} parent=5 // pred_check_branch
        %216 = sbr.rel (%p213) target = $region12
      $region11: #{tpu_custom_call.1} parent=5 // pred_region
        %s217 = ssub.s32 %s15, 1
        // Predicated region
        $region13: #{tpu_custom_call.1} parent=11 // pred_check
          %p218 = pneg %p74
        $region14: #{tpu_custom_call.1} parent=11 // pred_check_branch
          %220 = sbr.rel (%p218) target = $region16
        $region15: #{tpu_custom_call.1} parent=11 // pred_region
          _
        $region16: #{tpu_custom_call.1} parent=11 // pred_fallthru
          _
        // Predicated region
        $region17: #{tpu_custom_call.1} parent=11 // pred_check
          %p221 = pneg %p154
        $region18: #{tpu_custom_call.1} parent=11 // pred_check_branch
          %223 = sbr.rel (%p221) target = $region20
        $region19: #{tpu_custom_call.1} parent=11 // pred_region
          %s224 = smul.u32 2, %s25
          %p225 = scmp.lt.s32.totalorder %s224, 1
          %s226 = scalar_select %p225, %s224, 1
          %s227 = smul.addr %s226, 8
          %s228 = scalar_lea.vmem %s4, %s227
          %s229 = smul.u32 2, %s25
        $region20: #{tpu_custom_call.1} parent=11 // pred_fallthru
          _
        // Predicated region
        $region21: #{tpu_custom_call.1} parent=11 // pred_check
          %p230 = pneg %p175
        $region22: #{tpu_custom_call.1} parent=11 // pred_check_branch
          %232 = sbr.rel (%p230) target = $region24
        $region23: #{tpu_custom_call.1} parent=11 // pred_region
          _
        $region24: #{tpu_custom_call.1} parent=11 // pred_fallthru
          _
      $region12: #{tpu_custom_call.1} parent=5 // pred_fallthru
        _
      %p233 = scmp.lt.s32.totalorder %s15, 2
      // Predicated region
      $region25: #{tpu_custom_call.1} parent=5 // pred_check
        %p234 = pneg %p233
      $region26: #{tpu_custom_call.1} parent=5 // pred_check_branch
        %236 = sbr.rel (%p234) target = $region28
      $region27: #{tpu_custom_call.1} parent=5 // pred_region
        // Predicated region
        $region29: #{tpu_custom_call.1} parent=27 // pred_check
          %p237 = pneg %p47
        $region30: #{tpu_custom_call.1} parent=27 // pred_check_branch
          %239 = sbr.rel (%p237) target = $region32
        $region31: #{tpu_custom_call.1} parent=27 // pred_region
          %p240 = scmp.lt.s32.totalorder %s22, 1
          %s241 = scalar_select %p240, %s22, 1
          %s242 = smul.addr %s241, 2
          %s243 = scalar_lea.vmem %s0, %s242
        $region32: #{tpu_custom_call.1} parent=27 // pred_fallthru
          _
        // Predicated region
        $region33: #{tpu_custom_call.1} parent=27 // pred_check
          %p244 = pneg %p96
        $region34: #{tpu_custom_call.1} parent=27 // pred_check_branch
          %246 = sbr.rel (%p244) target = $region36
        $region35: #{tpu_custom_call.1} parent=27 // pred_region
          %s247 = sand.u32 %s86, 1
          %s248 = scalar_lea.sflag [#allocation4], %s247
          %s249 = sand.u32 %s86, 1
          %s250 = smul.addr %s249, 64
          %s251 = scalar_lea.vmem [#allocation3], %s250
          %s252 = smul.u32 2, %s23
          %254 = vsyncadd %s248, 0
          %s255 = smul.addr %s22, 16
          %s256 = sadd.s32 %s252, %s255
          %s257 = smul.addr %s256, 4
          %s258 = scalar_lea.hbm %s2, %s257
          %s259 = sshll.u32 %s258, 4
          %s260 = int_to_ptr.hbm [resolvable:$true] %s259
          %s261 = sshll.u32 %s251, 4
          %s262 = int_to_ptr.vmem [resolvable:$true] %s261
          %267 = dma.hbm_to_vmem [thread:$0]  %s260, 1024, %s262, %s248, 128, 128, 8
        $region36: #{tpu_custom_call.1} parent=27 // pred_fallthru
          _
        // Predicated region
        $region37: #{tpu_custom_call.1} parent=27 // pred_check
          %p268 = pneg %p122
        $region38: #{tpu_custom_call.1} parent=27 // pred_check_branch
          %270 = sbr.rel (%p268) target = $region40
        $region39: #{tpu_custom_call.1} parent=27 // pred_region
          %p271 = scmp.lt.s32.totalorder %s22, 1
          %s272 = scalar_select %p271, %s22, 1
          %s273 = smul.addr %s272, 4
          %s274 = scalar_lea.vmem %s3, %s273
        $region40: #{tpu_custom_call.1} parent=27 // pred_fallthru
          _
      $region28: #{tpu_custom_call.1} parent=5 // pred_fallthru
        _
      %p275 = scmp.le.s32.totalorder 1, %s15
      %p276 = scmp.lt.s32.totalorder %s15, 3
      %p277 = pnand %p275, %p276
      %p278 = pneg %p277
      // Predicated region
      $region41: #{tpu_custom_call.1} parent=5 // pred_check
        _
      $region42: #{tpu_custom_call.1} parent=5 // pred_check_branch
        %280 = sbr.rel (%p277) target = $region44
      $region43: #{tpu_custom_call.1} parent=5 // pred_region
        %s281 = ssub.s32 %s15, 1
        %s282 = sand.u32 %s89, 1
        %s283 = scalar_lea.sflag [#allocation4], %s282
        %s284 = sand.u32 %s89, 1
        %s285 = smul.addr %s284, 64
        %s286 = scalar_lea.vmem [#allocation3], %s285
        // Predicated region
        $region45: #{tpu_custom_call.1} parent=43 // pred_check
          %p287 = pneg %p102
        $region46: #{tpu_custom_call.1} parent=43 // pred_check_branch
          %289 = sbr.rel (%p287) target = $region48
        $region47: #{tpu_custom_call.1} parent=43 // pred_region
          %291 = dma.done %s283, 1024
        $region48: #{tpu_custom_call.1} parent=43 // pred_fallthru
          _
        %p292 = scmp.lt.s32.totalorder %s24, 1
        %s293 = scalar_select %p292, %s24, 1
        %s294 = smul.addr %s293, 2
        %s295 = scalar_lea.vmem %s0, %s294
        %p296 = pneg %p53
        %p297 = pneg %p50
        %p298 = pneg %p74
        %p299 = pneg %p71
        %s300 = sand.u32 %s89, 1
        %s301 = scalar_lea.sflag [#allocation4], %s300
        %s302 = sand.u32 %s89, 1
        %s303 = smul.addr %s302, 64
        %s304 = scalar_lea.vmem [#allocation3], %s303
        %p305 = pneg %p102
        %p306 = pneg %p99
        %p307 = scmp.lt.s32.totalorder %s24, 1
        %s308 = scalar_select %p307, %s24, 1
        %s309 = smul.addr %s308, 4
        %s310 = scalar_lea.vmem %s3, %s309
        %p311 = pneg %p128
        %p312 = pneg %p125
        %s313 = smul.u32 2, %s25
        %p314 = scmp.lt.s32.totalorder %s313, 1
        %s315 = scalar_select %p314, %s313, 1
        %s316 = smul.addr %s315, 8
        %s317 = scalar_lea.vmem %s4, %s316
        %p318 = pneg %p154
        %p319 = pneg %p151
        %p320 = pneg %p175
        %p321 = pneg %p172
        %p322 = pneg %p203
        %p323 = pneg %p200
        %s324 = smul.u32 2, %s25
        %p325 = scmp.lt.s32.totalorder %s24, 1
        %s326 = scalar_select %p325, %s24, 1
        %p327 = scmp.lt.s32.totalorder %s324, 1
        %s328 = scalar_select %p327, %s324, 1
        %s329 = smul.addr %s326, 2
        %s330 = sadd.s32 %s328, %s329
        %s331 = smul.addr %s330, 4
        %s332 = scalar_lea.vmem %s6, %s331
        %p333 = scmp.lt.s32.totalorder %s24, 1
        %s334 = scalar_select %p333, %s24, 1
        %s335 = smul.addr %s334, 2
        %s336 = scalar_lea.vmem %s0, %s335
        %s337 = smul.u32 2, %s25
        %p338 = scmp.lt.s32.totalorder %s24, 1
        %s339 = scalar_select %p338, %s24, 1
        %s340 = smul.addr %s339, 4
        %s341 = scalar_lea.vmem %s3, %s340
        %s342 = smul.u32 2, %s25
        %p343 = scmp.lt.s32.totalorder %s342, 1
        %s344 = scalar_select %p343, %s342, 1
        %s345 = smul.addr %s344, 8
        %s346 = scalar_lea.vmem %s4, %s345
        %s347 = smul.u32 2, %s25
        %s348 = smul.u32 2, %s25
        %p349 = scmp.lt.s32.totalorder %s24, 1
        %s350 = scalar_select %p349, %s24, 1
        %p351 = scmp.lt.s32.totalorder %s348, 1
        %s352 = scalar_select %p351, %s348, 1
        %s353 = smul.addr %s350, 2
        %s354 = sadd.s32 %s352, %s353
        %s355 = smul.addr %s354, 4
        %s356 = scalar_lea.vmem %s6, %s355
        %s357 = smul.u32 2, %s25
        %v359 = vld [vmem:[%s336] sm:$0x3]
        %v360 = vld [vmem:[%s286] sm:$0xff]
        %v361 = vld [vmem:[%s286 + $0x8] sm:$0xff]
        %v362 = vld [vmem:[%s286 + $0x10] sm:$0xff]
        %v363 = vld [vmem:[%s286 + $0x18] sm:$0xff]
        %v364 = vld [vmem:[%s286 + $0x20] sm:$0xff]
        %v365 = vld [vmem:[%s286 + $0x28] sm:$0xff]
        %v366 = vld [vmem:[%s286 + $0x30] sm:$0xff]
        %v367 = vld [vmem:[%s286 + $0x38] sm:$0xff]
        %v368 = vld [vmem:[%s1] sm:$0x7]
        %370 = vset.pattern.permute.xlu0 0
        %371 = vperm.xlu0 %370, %v368
        %v372 = vpop.permute.xlu0 %371
        %v382 = vunpack.c.l.b16 %v360
        %v383 = vunpack.c.h.b16 %v360
        %v384 = vunpack.c.l.b16 %v361
        %v385 = vunpack.c.h.b16 %v361
        %v386 = vunpack.c.l.b16 %v362
        %v387 = vunpack.c.h.b16 %v362
        %v388 = vunpack.c.l.b16 %v363
        %v389 = vunpack.c.h.b16 %v363
        %v390 = vunpack.c.l.b16 %v364
        %v391 = vunpack.c.h.b16 %v364
        %v392 = vunpack.c.l.b16 %v365
        %v393 = vunpack.c.h.b16 %v365
        %v394 = vunpack.c.l.b16 %v366
        %v395 = vunpack.c.h.b16 %v366
        %v396 = vunpack.c.l.b16 %v367
        %v397 = vunpack.c.h.b16 %v367
        %v398 = vpack.c.b16 %v384, %v382
        %v399 = vpack.c.b16 %v385, %v383
        %v400 = vpack.c.b16 %v388, %v386
        %v401 = vpack.c.b16 %v389, %v387
        %v402 = vpack.c.b16 %v392, %v390
        %v403 = vpack.c.b16 %v393, %v391
        %v404 = vpack.c.b16 %v396, %v394
        %v405 = vpack.c.b16 %v397, %v395
        %vm414 = vcmask 523264
        %v416 = vsel %vm414, %v359, 0
        %418 = vmatpush.bf16.msra.mxu0 0
        %419 = vmatpush.bf16.msra.mxu0 0
        %420 = vmatpush.bf16.msra.mxu0 0
        %421 = vmatpush.bf16.msra.mxu0 0
        %422 = vmatpush.bf16.msra.mxu0 %v404
        %423 = vmatpush.bf16.msra.mxu0 %v402
        %424 = vmatpush.bf16.msra.mxu0 %v400
        %425 = vmatpush.bf16.msra.mxu0 %v398
        %426 = vmatmul.bf16.gmra.mxu0 %v416
        %v427 = vpop.f32.mrf.mxu0
        %v428 = vadd.f32 %v372, %v427
        %v429 = vpop.f32.mrf.mxu0
        %430 = vdwg.mxu0
        %431 = vmatpush.bf16.msra.mxu0 0
        %432 = vmatpush.bf16.msra.mxu0 0
        %433 = vmatpush.bf16.msra.mxu0 0
        %434 = vmatpush.bf16.msra.mxu0 0
        %435 = vmatpush.bf16.msra.mxu0 %v405
        %436 = vmatpush.bf16.msra.mxu0 %v403
        %437 = vmatpush.bf16.msra.mxu0 %v401
        %438 = vmatpush.bf16.msra.mxu0 %v399
        %439 = vmatmul.bf16.gmra.mxu0 %v416
        %v440 = vpop.f32.mrf.mxu0
        %v441 = vadd.f32 %v372, %v440
        %v442 = vpop.f32.mrf.mxu0
        %443 = vdwg.mxu0
        %v446 = vrot.slane %v441, 4
        %vm447 = vcmask 1043456
        %v448 = vsel %vm447, %v428, %v446
        %450 = vst [vmem:[%s356] sm:$0x77] %v448
        %v451 = vld [vmem:[%s346] sm:$0xff]
        %v452 = vld [vmem:[%s346 + $0x8] sm:$0xff]
        %v453 = vld [vmem:[%s341] sm:$0xf]
        %v454 = vunpack.c.l.bf16 %v453
        %vm455 = vcmask 64512
        %v457 = vsel %vm455, %v451, 0
        %v460 = vsel %vm455, %v452, 0
        %462 = vmatpush.msra.mxu0 0.0
        %463 = vmatpush.msra.mxu0 0.0
        %464 = vmatpush.msra.mxu0 0.0
        %465 = vmatpush.msra.mxu0 0.0
        %466 = vmatpush.msra.mxu0 0.0
        %467 = vmatpush.msra.mxu0 0.0
        %468 = vmatpush.msra.mxu0 0.0
        %469 = vmatpush.msra.mxu0 0.0
        %470 = vmatpush.msra.mxu0 0.0
        %471 = vmatpush.msra.mxu0 0.0
        %472 = vmatpush.msra.mxu0 0.0
        %473 = vmatpush.msra.mxu0 0.0
        %474 = vmatpush.msra.mxu0 0.0
        %475 = vmatpush.msra.mxu0 0.0
        %476 = vmatpush.msra.mxu0 0.0
        %477 = vmatpush.msra.mxu0 %v454
        %478 = vmatmul.f32.gmra.mxu0 %v457
        %v479 = vpop.f32.mrf.mxu0
        %v480 = vadd.f32 0.0, %v479
        %481 = vmatmul.f32.gmra.mxu0 %v460
        %v482 = vpop.f32.mrf.mxu0
        %v483 = vadd.f32 0.0, %v482
        %484 = vdwg.mxu0
        %v485 = vld [vmem:[%s5] sm:$0xff]
        %v487 = vsel %vm455, %v480, 0
        %v490 = vsel %vm455, %v483, 0
        %492 = vmatpush.msra.mxu0 0.0
        %493 = vmatpush.msra.mxu0 0.0
        %494 = vmatpush.msra.mxu0 0.0
        %495 = vmatpush.msra.mxu0 0.0
        %496 = vmatpush.msra.mxu0 0.0
        %497 = vmatpush.msra.mxu0 0.0
        %498 = vmatpush.msra.mxu0 0.0
        %499 = vmatpush.msra.mxu0 0.0
        %500 = vmatpush.msra.mxu0 0.0
        %501 = vmatpush.msra.mxu0 0.0
        %502 = vmatpush.msra.mxu0 0.0
        %503 = vmatpush.msra.mxu0 0.0
        %504 = vmatpush.msra.mxu0 0.0
        %505 = vmatpush.msra.mxu0 0.0
        %506 = vmatpush.msra.mxu0 0.0
        %507 = vmatpush.msra.mxu0 %v485
        %508 = vmatmul.f32.gmra.mxu0 %v487
        %v509 = vpop.f32.mrf.mxu0
        %v510 = vadd.f32 0.0, %v509
        %511 = vmatmul.f32.gmra.mxu0 %v490
        %v512 = vpop.f32.mrf.mxu0
        %v513 = vadd.f32 0.0, %v512
        %514 = vdwg.mxu0
        %vm515 = vcmask 130048
        %516 = vst.msk [vmem:[#allocation2] sm:$0xff] %vm515, %v510
        %517 = vst.msk [vmem:[#allocation2 + $0x8] sm:$0xff] %vm515, %v513
        %v518 = vld [vmem:[%s5] sm:$0xff]
        %519 = vrot.lane.b32.xlu0 %v480, 120
        %v520 = vpop.permute.xlu0 %519
        %521 = vrot.lane.b32.xlu0 %v483, 120
        %v522 = vpop.permute.xlu0 %521
        %v523 = vsel %vm455, %v520, 0
        %v525 = vsel %vm455, %v522, 0
        %527 = vmatpush.msra.mxu0 0.0
        %528 = vmatpush.msra.mxu0 0.0
        %529 = vmatpush.msra.mxu0 0.0
        %530 = vmatpush.msra.mxu0 0.0
        %531 = vmatpush.msra.mxu0 0.0
        %532 = vmatpush.msra.mxu0 0.0
        %533 = vmatpush.msra.mxu0 0.0
        %534 = vmatpush.msra.mxu0 0.0
        %535 = vmatpush.msra.mxu0 0.0
        %536 = vmatpush.msra.mxu0 0.0
        %537 = vmatpush.msra.mxu0 0.0
        %538 = vmatpush.msra.mxu0 0.0
        %539 = vmatpush.msra.mxu0 0.0
        %540 = vmatpush.msra.mxu0 0.0
        %541 = vmatpush.msra.mxu0 0.0
        %542 = vmatpush.msra.mxu0 %v518
        %543 = vmatmul.f32.gmra.mxu0 %v523
        %v544 = vpop.f32.mrf.mxu0
        %v545 = vadd.f32 0.0, %v544
        %546 = vmatmul.f32.gmra.mxu0 %v525
        %v547 = vpop.f32.mrf.mxu0
        %v548 = vadd.f32 0.0, %v547
        %549 = vdwg.mxu0
        %s550 = scalar_lea.vmem [#allocation2], 16
        %551 = vst.msk [vmem:[%s550] sm:$0xff] %vm515, %v545
        %552 = vst.msk [vmem:[%s550 + $0x8] sm:$0xff] %vm515, %v548
        %v553 = vld [vmem:[%s5] sm:$0xff]
        %554 = vrot.lane.b32.xlu0 %v480, 112
        %v555 = vpop.permute.xlu0 %554
        %556 = vrot.lane.b32.xlu0 %v483, 112
        %v557 = vpop.permute.xlu0 %556
        %v558 = vsel %vm455, %v555, 0
        %v560 = vsel %vm455, %v557, 0
        %562 = vmatpush.msra.mxu0 0.0
        %563 = vmatpush.msra.mxu0 0.0
        %564 = vmatpush.msra.mxu0 0.0
        %565 = vmatpush.msra.mxu0 0.0
        %566 = vmatpush.msra.mxu0 0.0
        %567 = vmatpush.msra.mxu0 0.0
        %568 = vmatpush.msra.mxu0 0.0
        %569 = vmatpush.msra.mxu0 0.0
        %570 = vmatpush.msra.mxu0 0.0
        %571 = vmatpush.msra.mxu0 0.0
        %572 = vmatpush.msra.mxu0 0.0
        %573 = vmatpush.msra.mxu0 0.0
        %574 = vmatpush.msra.mxu0 0.0
        %575 = vmatpush.msra.mxu0 0.0
        %576 = vmatpush.msra.mxu0 0.0
        %577 = vmatpush.msra.mxu0 %v553
        %578 = vmatmul.f32.gmra.mxu0 %v558
        %v579 = vpop.f32.mrf.mxu0
        %v580 = vadd.f32 0.0, %v579
        %581 = vmatmul.f32.gmra.mxu0 %v560
        %v582 = vpop.f32.mrf.mxu0
        %v583 = vadd.f32 0.0, %v582
        %584 = vdwg.mxu0
        %s585 = scalar_lea.vmem [#allocation2], 32
        %586 = vst.msk [vmem:[%s585] sm:$0xff] %vm515, %v580
        %587 = vst.msk [vmem:[%s585 + $0x8] sm:$0xff] %vm515, %v583
        %v588 = vld [vmem:[%s356] sm:$0x1]
        %v589 = vld [vmem:[#allocation2] sm:$0x1]
        %v590 = vadd.f32 %v588, %v589
        %vm591 = vcmask 122880
        %592 = vst.msk [vmem:[%s356] sm:$0x1] %vm591, %v590
        %v593 = vld [vmem:[%s356] sm:$0x1]
        %v594 = vld [vmem:[#allocation2 + $0x1] sm:$0x1]
        %596 = vrot.lane.b32.xlu0 %v594, 16
        %v597 = vpop.permute.xlu0 %596
        %v599 = vadd.f32 %v593, %v597
        %vm600 = vcmask 254080
        %601 = vst.msk [vmem:[%s356] sm:$0x1] %vm600, %v599
        %v602 = vld [vmem:[%s356] sm:$0x1]
        %v603 = vld [vmem:[#allocation2 + $0x2] sm:$0x1]
        %605 = vrot.lane.b32.xlu0 %v603, 32
        %v606 = vpop.permute.xlu0 %605
        %v608 = vadd.f32 %v602, %v606
        %vm609 = vcmask 385280
        %610 = vst.msk [vmem:[%s356] sm:$0x1] %vm609, %v608
        %v611 = vld [vmem:[%s356] sm:$0x1]
        %v612 = vld [vmem:[#allocation2 + $0x3] sm:$0x1]
        %614 = vrot.lane.b32.xlu0 %v612, 48
        %v615 = vpop.permute.xlu0 %614
        %v617 = vadd.f32 %v611, %v615
        %vm618 = vcmask 516480
        %619 = vst.msk [vmem:[%s356] sm:$0x1] %vm618, %v617
        %v620 = vld [vmem:[%s356] sm:$0x1]
        %v621 = vld [vmem:[#allocation2 + $0x4] sm:$0x1]
        %623 = vrot.lane.b32.xlu0 %v621, 64
        %v624 = vpop.permute.xlu0 %623
        %v626 = vadd.f32 %v620, %v624
        %vm627 = vcmask 647680
        %628 = vst.msk [vmem:[%s356] sm:$0x1] %vm627, %v626
        %v629 = vld [vmem:[%s356] sm:$0x1]
        %v630 = vld [vmem:[#allocation2 + $0x5] sm:$0x1]
        %632 = vrot.lane.b32.xlu0 %v630, 80
        %v633 = vpop.permute.xlu0 %632
        %v635 = vadd.f32 %v629, %v633
        %vm636 = vcmask 778880
        %637 = vst.msk [vmem:[%s356] sm:$0x1] %vm636, %v635
        %v638 = vld [vmem:[%s356] sm:$0x1]
        %v639 = vld [vmem:[#allocation2 + $0x6] sm:$0x1]
        %641 = vrot.lane.b32.xlu0 %v639, 96
        %v642 = vpop.permute.xlu0 %641
        %v644 = vadd.f32 %v638, %v642
        %vm645 = vcmask 910080
        %646 = vst.msk [vmem:[%s356] sm:$0x1] %vm645, %v644
        %v647 = vld [vmem:[%s356] sm:$0x1]
        %v648 = vld [vmem:[#allocation2 + $0x7] sm:$0x1]
        %650 = vrot.lane.b32.xlu0 %v648, 112
        %v651 = vpop.permute.xlu0 %650
        %v653 = vadd.f32 %v647, %v651
        %vm654 = vcmask 1041280
        %655 = vst.msk [vmem:[%s356] sm:$0x1] %vm654, %v653
        %v656 = vld [vmem:[%s356 + $0x4] sm:$0x1]
        %v657 = vld [vmem:[#allocation2 + $0x8] sm:$0x1]
        %v658 = vadd.f32 %v656, %v657
        %659 = vst.msk [vmem:[%s356 + $0x4] sm:$0x1] %vm591, %v658
        %v660 = vld [vmem:[%s356 + $0x4] sm:$0x1]
        %v661 = vld [vmem:[#allocation2 + $0x9] sm:$0x1]
        %663 = vrot.lane.b32.xlu0 %v661, 16
        %v664 = vpop.permute.xlu0 %663
        %v666 = vadd.f32 %v660, %v664
        %667 = vst.msk [vmem:[%s356 + $0x4] sm:$0x1] %vm600, %v666
        %v668 = vld [vmem:[%s356 + $0x4] sm:$0x1]
        %v669 = vld [vmem:[#allocation2 + $0xa] sm:$0x1]
        %671 = vrot.lane.b32.xlu0 %v669, 32
        %v672 = vpop.permute.xlu0 %671
        %v674 = vadd.f32 %v668, %v672
        %675 = vst.msk [vmem:[%s356 + $0x4] sm:$0x1] %vm609, %v674
        %v676 = vld [vmem:[%s356 + $0x4] sm:$0x1]
        %v677 = vld [vmem:[#allocation2 + $0xb] sm:$0x1]
        %679 = vrot.lane.b32.xlu0 %v677, 48
        %v680 = vpop.permute.xlu0 %679
        %v682 = vadd.f32 %v676, %v680
        %683 = vst.msk [vmem:[%s356 + $0x4] sm:$0x1] %vm618, %v682
        %v684 = vld [vmem:[%s356 + $0x4] sm:$0x1]
        %v685 = vld [vmem:[#allocation2 + $0xc] sm:$0x1]
        %687 = vrot.lane.b32.xlu0 %v685, 64
        %v688 = vpop.permute.xlu0 %687
        %v690 = vadd.f32 %v684, %v688
        %691 = vst.msk [vmem:[%s356 + $0x4] sm:$0x1] %vm627, %v690
        %v692 = vld [vmem:[%s356 + $0x4] sm:$0x1]
        %v693 = vld [vmem:[#allocation2 + $0xd] sm:$0x1]
        %695 = vrot.lane.b32.xlu0 %v693, 80
        %v696 = vpop.permute.xlu0 %695
        %v698 = vadd.f32 %v692, %v696
        %699 = vst.msk [vmem:[%s356 + $0x4] sm:$0x1] %vm636, %v698
        %v700 = vld [vmem:[%s356 + $0x4] sm:$0x1]
        %v701 = vld [vmem:[#allocation2 + $0xe] sm:$0x1]
        %703 = vrot.lane.b32.xlu0 %v701, 96
        %v704 = vpop.permute.xlu0 %703
        %v706 = vadd.f32 %v700, %v704
        %707 = vst.msk [vmem:[%s356 + $0x4] sm:$0x1] %vm645, %v706
        %v708 = vld [vmem:[%s356 + $0x4] sm:$0x1]
        %v709 = vld [vmem:[#allocation2 + $0xf] sm:$0x1]
        %711 = vrot.lane.b32.xlu0 %v709, 112
        %v712 = vpop.permute.xlu0 %711
        %v714 = vadd.f32 %v708, %v712
        %715 = vst.msk [vmem:[%s356 + $0x4] sm:$0x1] %vm654, %v714
        %v716 = vld [vmem:[%s356 + $0x1] sm:$0x1]
        %v717 = vld [vmem:[%s550] sm:$0x1]
        %v718 = vadd.f32 %v716, %v717
        %719 = vst.msk [vmem:[%s356 + $0x1] sm:$0x1] %vm591, %v718
        %v720 = vld [vmem:[%s356 + $0x1] sm:$0x1]
        %v721 = vld [vmem:[%s550 + $0x1] sm:$0x1]
        %723 = vrot.lane.b32.xlu0 %v721, 16
        %v724 = vpop.permute.xlu0 %723
        %v726 = vadd.f32 %v720, %v724
        %727 = vst.msk [vmem:[%s356 + $0x1] sm:$0x1] %vm600, %v726
        %v728 = vld [vmem:[%s356 + $0x1] sm:$0x1]
        %v729 = vld [vmem:[%s550 + $0x2] sm:$0x1]
        %731 = vrot.lane.b32.xlu0 %v729, 32
        %v732 = vpop.permute.xlu0 %731
        %v734 = vadd.f32 %v728, %v732
        %735 = vst.msk [vmem:[%s356 + $0x1] sm:$0x1] %vm609, %v734
        %v736 = vld [vmem:[%s356 + $0x1] sm:$0x1]
        %v737 = vld [vmem:[%s550 + $0x3] sm:$0x1]
        %739 = vrot.lane.b32.xlu0 %v737, 48
        %v740 = vpop.permute.xlu0 %739
        %v742 = vadd.f32 %v736, %v740
        %743 = vst.msk [vmem:[%s356 + $0x1] sm:$0x1] %vm618, %v742
        %v744 = vld [vmem:[%s356 + $0x1] sm:$0x1]
        %v745 = vld [vmem:[%s550 + $0x4] sm:$0x1]
        %747 = vrot.lane.b32.xlu0 %v745, 64
        %v748 = vpop.permute.xlu0 %747
        %v750 = vadd.f32 %v744, %v748
        %751 = vst.msk [vmem:[%s356 + $0x1] sm:$0x1] %vm627, %v750
        %v752 = vld [vmem:[%s356 + $0x1] sm:$0x1]
        %v753 = vld [vmem:[%s550 + $0x5] sm:$0x1]
        %755 = vrot.lane.b32.xlu0 %v753, 80
        %v756 = vpop.permute.xlu0 %755
        %v758 = vadd.f32 %v752, %v756
        %759 = vst.msk [vmem:[%s356 + $0x1] sm:$0x1] %vm636, %v758
        %v760 = vld [vmem:[%s356 + $0x1] sm:$0x1]
        %v761 = vld [vmem:[%s550 + $0x6] sm:$0x1]
        %763 = vrot.lane.b32.xlu0 %v761, 96
        %v764 = vpop.permute.xlu0 %763
        %v766 = vadd.f32 %v760, %v764
        %767 = vst.msk [vmem:[%s356 + $0x1] sm:$0x1] %vm645, %v766
        %v768 = vld [vmem:[%s356 + $0x1] sm:$0x1]
        %v769 = vld [vmem:[%s550 + $0x7] sm:$0x1]
        %771 = vrot.lane.b32.xlu0 %v769, 112
        %v772 = vpop.permute.xlu0 %771
        %v774 = vadd.f32 %v768, %v772
        %775 = vst.msk [vmem:[%s356 + $0x1] sm:$0x1] %vm654, %v774
        %v776 = vld [vmem:[%s356 + $0x5] sm:$0x1]
        %v777 = vld [vmem:[%s550 + $0x8] sm:$0x1]
        %v778 = vadd.f32 %v776, %v777
        %779 = vst.msk [vmem:[%s356 + $0x5] sm:$0x1] %vm591, %v778
        %v780 = vld [vmem:[%s356 + $0x5] sm:$0x1]
        %v781 = vld [vmem:[%s550 + $0x9] sm:$0x1]
        %783 = vrot.lane.b32.xlu0 %v781, 16
        %v784 = vpop.permute.xlu0 %783
        %v786 = vadd.f32 %v780, %v784
        %787 = vst.msk [vmem:[%s356 + $0x5] sm:$0x1] %vm600, %v786
        %v788 = vld [vmem:[%s356 + $0x5] sm:$0x1]
        %v789 = vld [vmem:[%s550 + $0xa] sm:$0x1]
        %791 = vrot.lane.b32.xlu0 %v789, 32
        %v792 = vpop.permute.xlu0 %791
        %v794 = vadd.f32 %v788, %v792
        %795 = vst.msk [vmem:[%s356 + $0x5] sm:$0x1] %vm609, %v794
        %v796 = vld [vmem:[%s356 + $0x5] sm:$0x1]
        %v797 = vld [vmem:[%s550 + $0xb] sm:$0x1]
        %799 = vrot.lane.b32.xlu0 %v797, 48
        %v800 = vpop.permute.xlu0 %799
        %v802 = vadd.f32 %v796, %v800
        %803 = vst.msk [vmem:[%s356 + $0x5] sm:$0x1] %vm618, %v802
        %v804 = vld [vmem:[%s356 + $0x5] sm:$0x1]
        %v805 = vld [vmem:[%s550 + $0xc] sm:$0x1]
        %807 = vrot.lane.b32.xlu0 %v805, 64
        %v808 = vpop.permute.xlu0 %807
        %v810 = vadd.f32 %v804, %v808
        %811 = vst.msk [vmem:[%s356 + $0x5] sm:$0x1] %vm627, %v810
        %v812 = vld [vmem:[%s356 + $0x5] sm:$0x1]
        %v813 = vld [vmem:[%s550 + $0xd] sm:$0x1]
        %815 = vrot.lane.b32.xlu0 %v813, 80
        %v816 = vpop.permute.xlu0 %815
        %v818 = vadd.f32 %v812, %v816
        %819 = vst.msk [vmem:[%s356 + $0x5] sm:$0x1] %vm636, %v818
        %v820 = vld [vmem:[%s356 + $0x5] sm:$0x1]
        %v821 = vld [vmem:[%s550 + $0xe] sm:$0x1]
        %823 = vrot.lane.b32.xlu0 %v821, 96
        %v824 = vpop.permute.xlu0 %823
        %v826 = vadd.f32 %v820, %v824
        %827 = vst.msk [vmem:[%s356 + $0x5] sm:$0x1] %vm645, %v826
        %v828 = vld [vmem:[%s356 + $0x5] sm:$0x1]
        %v829 = vld [vmem:[%s550 + $0xf] sm:$0x1]
        %831 = vrot.lane.b32.xlu0 %v829, 112
        %v832 = vpop.permute.xlu0 %831
        %v834 = vadd.f32 %v828, %v832
        %835 = vst.msk [vmem:[%s356 + $0x5] sm:$0x1] %vm654, %v834
        %v836 = vld [vmem:[%s356 + $0x2] sm:$0x1]
        %v837 = vld [vmem:[%s585] sm:$0x1]
        %v838 = vadd.f32 %v836, %v837
        %839 = vst.msk [vmem:[%s356 + $0x2] sm:$0x1] %vm591, %v838
        %v840 = vld [vmem:[%s356 + $0x2] sm:$0x1]
        %v841 = vld [vmem:[%s585 + $0x1] sm:$0x1]
        %843 = vrot.lane.b32.xlu0 %v841, 16
        %v844 = vpop.permute.xlu0 %843
        %v846 = vadd.f32 %v840, %v844
        %847 = vst.msk [vmem:[%s356 + $0x2] sm:$0x1] %vm600, %v846
        %v848 = vld [vmem:[%s356 + $0x2] sm:$0x1]
        %v849 = vld [vmem:[%s585 + $0x2] sm:$0x1]
        %851 = vrot.lane.b32.xlu0 %v849, 32
        %v852 = vpop.permute.xlu0 %851
        %v854 = vadd.f32 %v848, %v852
        %855 = vst.msk [vmem:[%s356 + $0x2] sm:$0x1] %vm609, %v854
        %v856 = vld [vmem:[%s356 + $0x2] sm:$0x1]
        %v857 = vld [vmem:[%s585 + $0x3] sm:$0x1]
        %859 = vrot.lane.b32.xlu0 %v857, 48
        %v860 = vpop.permute.xlu0 %859
        %v862 = vadd.f32 %v856, %v860
        %863 = vst.msk [vmem:[%s356 + $0x2] sm:$0x1] %vm618, %v862
        %v864 = vld [vmem:[%s356 + $0x2] sm:$0x1]
        %v865 = vld [vmem:[%s585 + $0x4] sm:$0x1]
        %867 = vrot.lane.b32.xlu0 %v865, 64
        %v868 = vpop.permute.xlu0 %867
        %v870 = vadd.f32 %v864, %v868
        %871 = vst.msk [vmem:[%s356 + $0x2] sm:$0x1] %vm627, %v870
        %v872 = vld [vmem:[%s356 + $0x2] sm:$0x1]
        %v873 = vld [vmem:[%s585 + $0x5] sm:$0x1]
        %875 = vrot.lane.b32.xlu0 %v873, 80
        %v876 = vpop.permute.xlu0 %875
        %v878 = vadd.f32 %v872, %v876
        %879 = vst.msk [vmem:[%s356 + $0x2] sm:$0x1] %vm636, %v878
        %v880 = vld [vmem:[%s356 + $0x2] sm:$0x1]
        %v881 = vld [vmem:[%s585 + $0x6] sm:$0x1]
        %883 = vrot.lane.b32.xlu0 %v881, 96
        %v884 = vpop.permute.xlu0 %883
        %v886 = vadd.f32 %v880, %v884
        %887 = vst.msk [vmem:[%s356 + $0x2] sm:$0x1] %vm645, %v886
        %v888 = vld [vmem:[%s356 + $0x2] sm:$0x1]
        %v889 = vld [vmem:[%s585 + $0x7] sm:$0x1]
        %891 = vrot.lane.b32.xlu0 %v889, 112
        %v892 = vpop.permute.xlu0 %891
        %v894 = vadd.f32 %v888, %v892
        %895 = vst.msk [vmem:[%s356 + $0x2] sm:$0x1] %vm654, %v894
        %v896 = vld [vmem:[%s356 + $0x6] sm:$0x1]
        %v897 = vld [vmem:[%s585 + $0x8] sm:$0x1]
        %v898 = vadd.f32 %v896, %v897
        %899 = vst.msk [vmem:[%s356 + $0x6] sm:$0x1] %vm591, %v898
        %v900 = vld [vmem:[%s356 + $0x6] sm:$0x1]
        %v901 = vld [vmem:[%s585 + $0x9] sm:$0x1]
        %903 = vrot.lane.b32.xlu0 %v901, 16
        %v904 = vpop.permute.xlu0 %903
        %v906 = vadd.f32 %v900, %v904
        %907 = vst.msk [vmem:[%s356 + $0x6] sm:$0x1] %vm600, %v906
        %v908 = vld [vmem:[%s356 + $0x6] sm:$0x1]
        %v909 = vld [vmem:[%s585 + $0xa] sm:$0x1]
        %911 = vrot.lane.b32.xlu0 %v909, 32
        %v912 = vpop.permute.xlu0 %911
        %v914 = vadd.f32 %v908, %v912
        %915 = vst.msk [vmem:[%s356 + $0x6] sm:$0x1] %vm609, %v914
        %v916 = vld [vmem:[%s356 + $0x6] sm:$0x1]
        %v917 = vld [vmem:[%s585 + $0xb] sm:$0x1]
        %919 = vrot.lane.b32.xlu0 %v917, 48
        %v920 = vpop.permute.xlu0 %919
        %v922 = vadd.f32 %v916, %v920
        %923 = vst.msk [vmem:[%s356 + $0x6] sm:$0x1] %vm618, %v922
        %v924 = vld [vmem:[%s356 + $0x6] sm:$0x1]
        %v925 = vld [vmem:[%s585 + $0xc] sm:$0x1]
        %927 = vrot.lane.b32.xlu0 %v925, 64
        %v928 = vpop.permute.xlu0 %927
        %v930 = vadd.f32 %v924, %v928
        %931 = vst.msk [vmem:[%s356 + $0x6] sm:$0x1] %vm627, %v930
        %v932 = vld [vmem:[%s356 + $0x6] sm:$0x1]
        %v933 = vld [vmem:[%s585 + $0xd] sm:$0x1]
        %935 = vrot.lane.b32.xlu0 %v933, 80
        %v936 = vpop.permute.xlu0 %935
        %v938 = vadd.f32 %v932, %v936
        %939 = vst.msk [vmem:[%s356 + $0x6] sm:$0x1] %vm636, %v938
        %v940 = vld [vmem:[%s356 + $0x6] sm:$0x1]
        %v941 = vld [vmem:[%s585 + $0xe] sm:$0x1]
        %943 = vrot.lane.b32.xlu0 %v941, 96
        %v944 = vpop.permute.xlu0 %943
        %v946 = vadd.f32 %v940, %v944
        %947 = vst.msk [vmem:[%s356 + $0x6] sm:$0x1] %vm645, %v946
        %v948 = vld [vmem:[%s356 + $0x6] sm:$0x1]
        %v949 = vld [vmem:[%s585 + $0xf] sm:$0x1]
        %951 = vrot.lane.b32.xlu0 %v949, 112
        %v952 = vpop.permute.xlu0 %951
        %v954 = vadd.f32 %v948, %v952
        %955 = vst.msk [vmem:[%s356 + $0x6] sm:$0x1] %vm654, %v954
        %s956 = smul.u32 2, %s25
        %p957 = scmp.lt.s32.totalorder %s24, 1
        %s958 = scalar_select %p957, %s24, 1
        %p959 = scmp.lt.s32.totalorder %s956, 1
        %s960 = scalar_select %p959, %s956, 1
        %s961 = smul.addr %s958, 2
        %s962 = sadd.s32 %s960, %s961
        %s963 = smul.addr %s962, 4
        %s964 = scalar_lea.vmem %s6, %s963
        // Predicated region
        $region49: #{tpu_custom_call.1} parent=43 // pred_check
          %p965 = pneg %p200
        $region50: #{tpu_custom_call.1} parent=43 // pred_check_branch
          %967 = sbr.rel (%p965) target = $region52
        $region51: #{tpu_custom_call.1} parent=43 // pred_region
          %s968 = smul.u32 2, %s25
        $region52: #{tpu_custom_call.1} parent=43 // pred_fallthru
          _
      $region44: #{tpu_custom_call.1} parent=5 // pred_fallthru
        _
      %p969 = scmp.le.s32.totalorder 2, %s15
      // Predicated region
      $region53: #{tpu_custom_call.1} parent=5 // pred_check
        %p970 = pneg %p969
      $region54: #{tpu_custom_call.1} parent=5 // pred_check_branch
        %972 = sbr.rel (%p970) target = $region56
      $region55: #{tpu_custom_call.1} parent=5 // pred_region
        %s973 = ssub.s32 %s15, 2
        // Predicated region
        $region57: #{tpu_custom_call.1} parent=55 // pred_check
          %p974 = pneg %p206
        $region58: #{tpu_custom_call.1} parent=55 // pred_check_branch
          %976 = sbr.rel (%p974) target = $region60
        $region59: #{tpu_custom_call.1} parent=55 // pred_region
          %s977 = smul.u32 2, %s27
          %p978 = scmp.lt.s32.totalorder %s26, 1
          %s979 = scalar_select %p978, %s26, 1
          %p980 = scmp.lt.s32.totalorder %s977, 1
          %s981 = scalar_select %p980, %s977, 1
          %s982 = smul.addr %s979, 2
          %s983 = sadd.s32 %s981, %s982
          %s984 = smul.addr %s983, 4
          %s985 = scalar_lea.vmem %s6, %s984
        $region60: #{tpu_custom_call.1} parent=55 // pred_fallthru
          _
      $region56: #{tpu_custom_call.1} parent=5 // pred_fallthru
        _
    $region6: #{tpu_custom_call.1} parent=1 // loop_footer
      %s19 = sadd.s32 1, %s15
    $region7: #{tpu_custom_call.1} parent=1 // loop_footer_branch
      %14 = sbr.rel target = $region3
    $region8: #{tpu_custom_call.1} parent=1 // loop_exit
      _
    %986 = vsyncpa [#allocation4], 1
    %s987 = scalar_lea.sflag [#allocation4], 1
    %988 = vsyncpa %s987, 1

</llo_original>
